<compile_context>
chip_gen: v6e
topology: v6e:2x2x1
jax: 0.10.0
libtpu: 0.0.40
codegen_flags: <defaults>
</compile_context>

<pallas_src>
import functools

import jax
import jax.numpy as jnp
from jax.experimental import pallas as pl
from jax.experimental.pallas import tpu as pltpu


def _round_up(x, m):
    return -(-x // m) * m


def _build_row_substitutions(*, mode, n_segment, shift_cfg, f_n, shift_depth):
    """Static per-row list of (ch_lo, ch_hi, src_row) substitutions.

    Mirrors the PyTorch slice-assignment order exactly (all RHS read the
    ORIGINAL x, as in torch)."""
    subs = [[] for _ in range(n_segment)]
    if mode == "shift_temporal":
        f = f_n // shift_depth
        if f > 0:
            for s1, s2 in shift_cfg:
                for d in range(shift_depth):
                    l = d + 1
                    f1 = 2 * d * f
                    f2 = (2 * d + 1) * f
                    for t in range(s1, s2 - l):      # out[t, f1:f1+f] = x[t+l]
                        subs[t].append((f1, f1 + f, t + l))
                    for t in range(s1 + l, s2):      # out[t, f2:f2+f] = x[t-l]
                        subs[t].append((f2, f2 + f, t - l))
    elif mode == "shift_temporal_modality":
        s1, s2, s3 = shift_cfg[0]
        f = f_n
        sh = s2 - s1
        if f > 0 and s3 > 0 and sh != 0:
            for t in range(s1, s1 + s3):             # out[t, 0:f] = x[t+sh]
                subs[t].append((0, f, t + sh))
            for t in range(s2, s2 + s3):             # out[t, 0:f] = x[t-sh]
                subs[t].append((0, f, t - sh))
    else:
        raise ValueError(f"Unknown mode: {mode}")
    return tuple(tuple(s) for s in subs)


def _shift_conv1x1_kernel(x_ref, w_ref, b_ref, o_ref, xs_ref, *,
                          subs, m_chunk, compute_dtype):
    """One grid step: (1, S, HW_T, C) in -> (1, S, HW_T, n_store) out."""
    s = x_ref.shape[1]
    hw_t = x_ref.shape[2]
    c = x_ref.shape[3]

    # ---- Phase 1: temporal shift, written into the fused-M VMEM scratch. ----
    # Distinct channel masks hoisted out of the segment loop (built once).
    ranges = sorted({(lo, hi) for row in subs for (lo, hi, _) in row})
    masks = {}
    if ranges:
        ch = jax.lax.broadcasted_iota(jnp.int32, (1, c), 1)
        masks = {r: (ch >= r[0]) & (ch < r[1]) for r in ranges}

    for t, row_subs in enumerate(subs):              # static loop over segments
        row = x_ref[0, t]                            # (HW_T, C), I/O dtype
        for (lo, hi, src) in row_subs:               # static, narrow channel ranges
            if lo <= 0 and hi >= c:                  # whole-channel swap: plain copy
                row = x_ref[0, src]
            else:                                    # reads ORIGINAL x (as in torch)
                row = jnp.where(masks[(lo, hi)], x_ref[0, src], row)
        xs_ref[pl.ds(t * hw_t, hw_t), :] = row.astype(compute_dtype)

    # ---- Phase 2: fused 1x1-conv matmul over M = S*HW_T rows. ----------------
    # M is chunked so the f32 result tile stays within ~16 vregs (no spills
    # when hw_tile is large).
    w = w_ref[...]                                   # (C, n_store), compute dtype
    b = b_ref[...]                                   # (1, n_store), f32
    if hw_t <= m_chunk:
        g = max(1, m_chunk // hw_t)                  # whole segments per matmul
        for t0 in range(0, s, g):
            gc = min(g, s - t0)
            rows = xs_ref[pl.ds(t0 * hw_t, gc * hw_t), :]
            y = (jnp.dot(rows, w, preferred_element_type=jnp.float32)
                 + b).astype(o_ref.dtype)
            for k in range(gc):                      # static slices of the value
                o_ref[0, t0 + k] = y[k * hw_t:(k + 1) * hw_t, :]
    else:
        for t in range(s):                           # chunk within a segment
            for p0 in range(0, hw_t, m_chunk):
                mm = min(m_chunk, hw_t - p0)
                rows = xs_ref[pl.ds(t * hw_t + p0, mm), :]
                y = (jnp.dot(rows, w, preferred_element_type=jnp.float32)
                     + b).astype(o_ref.dtype)
                o_ref[0, t, pl.ds(p0, mm)] = y


def _vmem_capacity_bytes():
    """Physical VMEM per TensorCore (conservative fallback: v7x's 64 MiB)."""
    try:
        info = pltpu.get_tpu_info()
        for attr in ("vmem_capacity_bytes", "vmem_bytes", "vmem_size_bytes"):
            v = getattr(info, attr, None)
            if isinstance(v, int) and v > 0:
                return v
    except Exception:
        pass
    return 64 << 20


def _block_footprint_bytes(n_segment, hw_tile, c, n_store,
                           in_itemsize, out_itemsize, compute_itemsize):
    # VMEM lays the minor dim out in 128-lane tiles -> account for lane padding.
    lanes_c = _round_up(c, 128)
    lanes_n = _round_up(n_store, 128)
    in_blk = n_segment * hw_tile * lanes_c * in_itemsize
    out_blk = n_segment * hw_tile * lanes_n * out_itemsize
    xs_blk = n_segment * hw_tile * lanes_c * compute_itemsize
    # double-buffered I/O blocks + single-buffered shift scratch + temps headroom
    return 2 * (in_blk + out_blk) + xs_blk + (1 << 20)


def _pick_hw_tile(hw_p, n_segment, c, n_store, in_itemsize, out_itemsize,
                  compute_itemsize, sub, budget_bytes):
    """Largest sublane-aligned divisor of hw_p whose VMEM footprint fits."""
    cands = sorted((d for d in range(sub, hw_p + 1, sub) if hw_p % d == 0),
                   reverse=True)
    for t in cands:
        fp = _block_footprint_bytes(n_segment, t, c, n_store, in_itemsize,
                                    out_itemsize, compute_itemsize)
        if fp <= budget_bytes:
            return t, fp
    t = cands[-1]
    fp = _block_footprint_bytes(n_segment, t, c, n_store, in_itemsize,
                                out_itemsize, compute_itemsize)
    raise ValueError(
        f"Smallest legal spatial tile ({t}) needs {fp} B of VMEM, above the "
        f"budget of {budget_bytes} B; reduce n_segment/channels or raise the budget.")


def tempo_modal_shift_forward_cl(x_cl, conv_w, conv_b, *, mode, shift_cfg, f_n,
                                 shift_depth, hw_tile=None,
                                 compute_dtype=jnp.bfloat16, out_dtype=None,
                                 vmem_budget_bytes=None):
    """Channels-last core: x_cl (n_batch, S, HW, C) -> (n_batch, S, HW, C_out)."""
    n_batch, n_segment, hw, c = x_cl.shape
    c_out = conv_w.shape[0]
    out_dtype = jnp.dtype(out_dtype) if out_dtype is not None else x_cl.dtype
    compute_dtype = jnp.dtype(compute_dtype)

    # Config sanity (PyTorch slicing would truncate/raise out of these bounds).
    if mode == "shift_temporal":
        for s1, s2 in shift_cfg:
            assert 0 <= s1 <= s2 <= n_segment, (s1, s2, n_segment)
    elif mode == "shift_temporal_modality":
        s1, s2, s3 = shift_cfg[0]
        assert 0 <= s1 and s1 + s3 <= n_segment and s2 + s3 <= n_segment
    else:
        raise ValueError(f"Unknown mode: {mode}")

    # Output-channel padding is only worth it when the extra HBM writeback
    # is small (<= 12.5%); otherwise keep c_out and accept a masked store.
    c_out_pad = _round_up(c_out, 128)
    pad_out = (c_out_pad - c_out) * 8 <= c_out
    n_store = c_out_pad if pad_out else c_out

    # Sublane granularity of the I/O dtypes (f32: 8, bf16: 16, int8/fp8: 32).
    sub = max(max(8, 32 // x_cl.dtype.itemsize),
              max(8, 32 // jnp.dtype(out_dtype).itemsize))

    hw_p = _round_up(hw, sub)
    if hw_p != hw:
        # TODO(synk): pad rows cost one extra small HBM pass; real nets should
        # keep H*W a multiple of the sublane tile or pad upstream.
        x_cl = jnp.pad(x_cl, ((0, 0), (0, 0), (0, hw_p - hw), (0, 0)))

    vmem_cap = _vmem_capacity_bytes()
    if vmem_budget_bytes is None:
        # ~1/3 of physical VMEM: big tiles on v5e/v6e (128 MiB physical),
        # conservative on v7x (64 MiB per TensorCore).
        vmem_budget_bytes = min(max(vmem_cap // 3, 16 << 20), 64 << 20)

    in_b = x_cl.dtype.itemsize
    out_b = jnp.dtype(out_dtype).itemsize
    cd_b = compute_dtype.itemsize
    if hw_tile is None:
        hw_tile, fp = _pick_hw_tile(hw_p, n_segment, c, n_store, in_b, out_b,
                                    cd_b, sub, vmem_budget_bytes)
    else:
        assert hw_p % hw_tile == 0 and hw_tile % sub == 0, (hw_tile, hw_p, sub)
        fp = _block_footprint_bytes(n_segment, hw_tile, c, n_store,
                                    in_b, out_b, cd_b)

    # Explicit VMEM limit: at least the v6e scoped default, never > 3/4 physical.
    vmem_limit = int(min(3 * vmem_cap // 4, max(32 << 20, 2 * fp)))

    # Matmul M-chunk so the f32 result tile is ~<= 16 vregs.
    lanes_n = _round_up(n_store, 128)
    m_chunk = max(64, min(256, ((16 * 8 * 128) // lanes_n) // 8 * 8))

    # 1x1-conv weight -> (C, n_store) in compute dtype; bias -> (1, n_store) f32.
    w_mat = jnp.transpose(conv_w.reshape(c_out, c), (1, 0)).astype(compute_dtype)
    b_mat = conv_b.astype(jnp.float32)
    if pad_out and c_out_pad != c_out:
        w_mat = jnp.pad(w_mat, ((0, 0), (0, c_out_pad - c_out)))
        b_mat = jnp.pad(b_mat, (0, c_out_pad - c_out))
    b_mat = b_mat.reshape(1, n_store)

    subs = _build_row_substitutions(mode=mode, n_segment=n_segment,
                                    shift_cfg=shift_cfg, f_n=f_n,
                                    shift_depth=shift_depth)
    kernel = functools.partial(_shift_conv1x1_kernel, subs=subs,
                               m_chunk=m_chunk, compute_dtype=compute_dtype)

    out = pl.pallas_call(
        kernel,
        out_shape=jax.ShapeDtypeStruct((n_batch, n_segment, hw_p, n_store),
                                       out_dtype),
        grid_spec=pltpu.PrefetchScalarGridSpec(
            num_scalar_prefetch=0,
            grid=(n_batch, hw_p // hw_tile),
            in_specs=[
                pl.BlockSpec((1, n_segment, hw_tile, c), lambda i, j: (i, 0, j, 0)),
                pl.BlockSpec((c, n_store), lambda i, j: (0, 0)),
                pl.BlockSpec((1, n_store), lambda i, j: (0, 0)),
            ],
            out_specs=pl.BlockSpec((1, n_segment, hw_tile, n_store),
                                   lambda i, j: (i, 0, j, 0)),
            scratch_shapes=[pltpu.VMEM((n_segment * hw_tile, c), compute_dtype)],
        ),
        compiler_params=pltpu.CompilerParams(
            dimension_semantics=("parallel", "parallel"),
            vmem_limit_bytes=vmem_limit),
    )(x_cl, w_mat, b_mat)

    # Drop the spatial / channel padding (fuses with downstream layout glue).
    return out[:, :, :hw, :c_out]


def tempo_modal_shift_forward(x_nchw, conv_w, conv_b, *, n_segment, mode,
                              shift_cfg, f_n, shift_depth, **kwargs):
    """NCHW convenience wrapper matching the PyTorch module's layout."""
    nt, c, h, w = x_nchw.shape
    assert nt % n_segment == 0
    n_batch = nt // n_segment
    c_out = conv_w.shape[0]
    # TODO(synk): these NCHW <-> channels-last transposes are extra full HBM
    # passes; keep activations channels-last end-to-end and call
    # tempo_modal_shift_forward_cl directly in a real network.
    x_cl = jnp.transpose(x_nchw, (0, 2, 3, 1)).reshape(n_batch, n_segment, h * w, c)
    y_cl = tempo_modal_shift_forward_cl(x_cl, conv_w, conv_b, mode=mode,
                                        shift_cfg=shift_cfg, f_n=f_n,
                                        shift_depth=shift_depth, **kwargs)
    y = y_cl.reshape(nt, h, w, c_out)
    return jnp.transpose(y, (0, 3, 1, 2))


def _reference_forward(x_nchw, conv_w, conv_b, *, n_segment, mode, shift_cfg,
                       f_n, shift_depth, compute_dtype=jnp.float32):
    """Pure-JAX replica of the PyTorch forward (shift + 1x1 conv), NCHW."""
    nt, c, h, w = x_nchw.shape
    n_batch = nt // n_segment
    x = x_nchw.reshape(n_batch, n_segment, c, h, w)
    out = x
    if mode == "shift_temporal":
        f = f_n // shift_depth
        for s1, s2 in shift_cfg:
            for d in range(shift_depth):
                l = d + 1
                f1 = 2 * d * f
                f2 = (2 * d + 1) * f
                out = out.at[:, s1:s2 - l, f1:f1 + f].set(x[:, s1 + l:s2, f1:f1 + f])
                out = out.at[:, s1 + l:s2, f2:f2 + f].set(x[:, s1:s2 - l, f2:f2 + f])
    elif mode == "shift_temporal_modality":
        s1, s2, s3 = shift_cfg[0]
        f = f_n
        out = out.at[:, s1:s1 + s3, 0:f].set(x[:, s2:s2 + s3, 0:f])
        out = out.at[:, s2:s2 + s3, 0:f].set(x[:, s1:s1 + s3, 0:f])
    shifted = out.reshape(nt, c, h, w)
    y = jnp.einsum("nchw,oc->nohw",
                   shifted.astype(compute_dtype),
                   conv_w.reshape(conv_w.shape[0], c).astype(compute_dtype),
                   preferred_element_type=jnp.float32)
    return y + conv_b[None, :, None, None]


if __name__ == "__main__":
    # Configuration mirroring TempoModalShift.__init__ with a 1x1 Conv2d layer.
    n_video_segments, n_motion_segments, n_audio_segments = 6, 0, 2
    n_segment = n_video_segments + n_motion_segments + n_audio_segments   # 8
    mode = "shift_temporal"
    f_div = 8
    shift_depth = 2
    c_in, c_out = 32, 48
    f_n = c_in // f_div                                                   # 4
    shift_cfg = [(0, n_video_segments + n_motion_segments)]               # [[0, 6]]

    n_batch, h, w = 2, 8, 8
    nt = n_batch * n_segment                                              # 16

    key = jax.random.PRNGKey(0)
    kx, kw, kb = jax.random.split(key, 3)
    x = jax.random.normal(kx, (nt, c_in, h, w), dtype=jnp.float32)
    conv_w = jax.random.normal(kw, (c_out, c_in, 1, 1), dtype=jnp.float32) * 0.05
    conv_b = jax.random.normal(kb, (c_out,), dtype=jnp.float32) * 0.05

    compute_dtype = jnp.bfloat16   # MXU operands; shift/select stays in I/O dtype

    y = tempo_modal_shift_forward(
        x, conv_w, conv_b, n_segment=n_segment, mode=mode, shift_cfg=shift_cfg,
        f_n=f_n, shift_depth=shift_depth, compute_dtype=compute_dtype)
    y = jax.block_until_ready(y)

    y_ref = _reference_forward(
        x, conv_w, conv_b, n_segment=n_segment, mode=mode, shift_cfg=shift_cfg,
        f_n=f_n, shift_depth=shift_depth, compute_dtype=compute_dtype)

    assert y.shape == (nt, c_out, h, w)
    max_err = float(jnp.max(jnp.abs(y - y_ref)))
    assert jnp.allclose(y, y_ref, atol=1e-2, rtol=1e-2), max_err
    print("KERNEL_OK")
</pallas_src>

<mosaic_0001>
module attributes {stable_mosaic.version = 11 : i64} {
  func.func @_shift_conv1x1_kernel(%arg0: i32, %arg1: i32, %arg2: memref<1x8x64x32xf32, #tpu.memory_space<vmem>>, %arg3: memref<32x48xbf16, #tpu.memory_space<vmem>>, %arg4: memref<1x48xf32, #tpu.memory_space<vmem>>, %arg5: memref<1x8x64x48xf32, #tpu.memory_space<vmem>>, %arg6: memref<512x32xbf16, #tpu.memory_space<vmem>>) attributes {dimension_semantics = [#tpu.dimension_semantics<parallel>, #tpu.dimension_semantics<parallel>], iteration_bounds = array<i64: 2, 1>, scalar_prefetch = 0 : i64, scratch_operands = 1 : i64, tpu.core_type = #tpu.core_type<tc>, window_params = [{transform_indices = @transform_0, window_bounds = array<i64: 1, 8, 64, 32>}, {pipeline_mode = #tpu.pipeline_mode<synchronous>, transform_indices = @transform_1, window_bounds = array<i64: 32, 48>}, {pipeline_mode = #tpu.pipeline_mode<synchronous>, transform_indices = @transform_2, window_bounds = array<i64: 1, 48>}, {transform_indices = @transform_3, window_bounds = array<i64: 1, 8, 64, 48>}]} {
    %0 = tpu.iota {dimensions = array<i32: 1>} : vector<1x32xi32>
    %c0_i32 = arith.constant 0 : i32
    %1 = vector.broadcast %c0_i32 : i32 to vector<1x32xi32>
    %2 = arith.cmpi sge, %0, %1 : vector<1x32xi32>
    %c2_i32 = arith.constant 2 : i32
    %3 = vector.broadcast %c2_i32 : i32 to vector<1x32xi32>
    %4 = arith.cmpi slt, %0, %3 : vector<1x32xi32>
    %5 = arith.andi %2, %4 : vector<1x32xi1>
    %c2_i32_0 = arith.constant 2 : i32
    %6 = vector.broadcast %c2_i32_0 : i32 to vector<1x32xi32>
    %7 = arith.cmpi sge, %0, %6 : vector<1x32xi32>
    %c4_i32 = arith.constant 4 : i32
    %8 = vector.broadcast %c4_i32 : i32 to vector<1x32xi32>
    %9 = arith.cmpi slt, %0, %8 : vector<1x32xi32>
    %10 = arith.andi %7, %9 : vector<1x32xi1>
    %c4_i32_1 = arith.constant 4 : i32
    %11 = vector.broadcast %c4_i32_1 : i32 to vector<1x32xi32>
    %12 = arith.cmpi sge, %0, %11 : vector<1x32xi32>
    %c6_i32 = arith.constant 6 : i32
    %13 = vector.broadcast %c6_i32 : i32 to vector<1x32xi32>
    %14 = arith.cmpi slt, %0, %13 : vector<1x32xi32>
    %15 = arith.andi %12, %14 : vector<1x32xi1>
    %c6_i32_2 = arith.constant 6 : i32
    %16 = vector.broadcast %c6_i32_2 : i32 to vector<1x32xi32>
    %17 = arith.cmpi sge, %0, %16 : vector<1x32xi32>
    %c8_i32 = arith.constant 8 : i32
    %18 = vector.broadcast %c8_i32 : i32 to vector<1x32xi32>
    %19 = arith.cmpi slt, %0, %18 : vector<1x32xi32>
    %20 = arith.andi %17, %19 : vector<1x32xi1>
    %c0 = arith.constant 0 : index
    %c0_3 = arith.constant 0 : index
    %c0_4 = arith.constant 0 : index
    %c0_5 = arith.constant 0 : index
    %21 = vector.load %arg2[%c0, %c0_3, %c0_4, %c0_5] : memref<1x8x64x32xf32, #tpu.memory_space<vmem>>, vector<1x1x64x32xf32>
    %22 = vector.shape_cast %21 : vector<1x1x64x32xf32> to vector<64x32xf32>
    %c0_6 = arith.constant 0 : index
    %c1 = arith.constant 1 : index
    %c0_7 = arith.constant 0 : index
    %c0_8 = arith.constant 0 : index
    %23 = vector.load %arg2[%c0_6, %c1, %c0_7, %c0_8] : memref<1x8x64x32xf32, #tpu.memory_space<vmem>>, vector<1x1x64x32xf32>
    %24 = vector.shape_cast %23 : vector<1x1x64x32xf32> to vector<64x32xf32>
    %25 = vector.shape_cast %5 : vector<1x32xi1> to vector<1x32xi1>
    %26 = vector.broadcast %25 : vector<1x32xi1> to vector<64x32xi1>
    %27 = arith.select %26, %24, %22 : vector<64x32xi1>, vector<64x32xf32>
    %c0_9 = arith.constant 0 : index
    %c2 = arith.constant 2 : index
    %c0_10 = arith.constant 0 : index
    %c0_11 = arith.constant 0 : index
    %28 = vector.load %arg2[%c0_9, %c2, %c0_10, %c0_11] : memref<1x8x64x32xf32, #tpu.memory_space<vmem>>, vector<1x1x64x32xf32>
    %29 = vector.shape_cast %28 : vector<1x1x64x32xf32> to vector<64x32xf32>
    %30 = vector.shape_cast %15 : vector<1x32xi1> to vector<1x32xi1>
    %31 = vector.broadcast %30 : vector<1x32xi1> to vector<64x32xi1>
    %32 = arith.select %31, %29, %27 : vector<64x32xi1>, vector<64x32xf32>
    %33 = arith.truncf %32 : vector<64x32xf32> to vector<64x32xbf16>
    %c0_12 = arith.constant 0 : index
    %c0_13 = arith.constant 0 : index
    %34 = vector.load %arg6[%c0_12, %c0_13] : memref<512x32xbf16, #tpu.memory_space<vmem>>, vector<64x32xbf16>
    tpu.vector_store %arg6[%c0_12, %c0_13], %33 {strides = array<i32>} : memref<512x32xbf16, #tpu.memory_space<vmem>>, vector<64x32xbf16>,
    %c0_14 = arith.constant 0 : index
    %c1_15 = arith.constant 1 : index
    %c0_16 = arith.constant 0 : index
    %c0_17 = arith.constant 0 : index
    %35 = vector.load %arg2[%c0_14, %c1_15, %c0_16, %c0_17] : memref<1x8x64x32xf32, #tpu.memory_space<vmem>>, vector<1x1x64x32xf32>
    %36 = vector.shape_cast %35 : vector<1x1x64x32xf32> to vector<64x32xf32>
    %c0_18 = arith.constant 0 : index
    %c2_19 = arith.constant 2 : index
    %c0_20 = arith.constant 0 : index
    %c0_21 = arith.constant 0 : index
    %37 = vector.load %arg2[%c0_18, %c2_19, %c0_20, %c0_21] : memref<1x8x64x32xf32, #tpu.memory_space<vmem>>, vector<1x1x64x32xf32>
    %38 = vector.shape_cast %37 : vector<1x1x64x32xf32> to vector<64x32xf32>
    %39 = vector.shape_cast %5 : vector<1x32xi1> to vector<1x32xi1>
    %40 = vector.broadcast %39 : vector<1x32xi1> to vector<64x32xi1>
    %41 = arith.select %40, %38, %36 : vector<64x32xi1>, vector<64x32xf32>
    %c0_22 = arith.constant 0 : index
    %c0_23 = arith.constant 0 : index
    %c0_24 = arith.constant 0 : index
    %c0_25 = arith.constant 0 : index
    %42 = vector.load %arg2[%c0_22, %c0_23, %c0_24, %c0_25] : memref<1x8x64x32xf32, #tpu.memory_space<vmem>>, vector<1x1x64x32xf32>
    %43 = vector.shape_cast %42 : vector<1x1x64x32xf32> to vector<64x32xf32>
    %44 = vector.shape_cast %10 : vector<1x32xi1> to vector<1x32xi1>
    %45 = vector.broadcast %44 : vector<1x32xi1> to vector<64x32xi1>
    %46 = arith.select %45, %43, %41 : vector<64x32xi1>, vector<64x32xf32>
    %c0_26 = arith.constant 0 : index
    %c3 = arith.constant 3 : index
    %c0_27 = arith.constant 0 : index
    %c0_28 = arith.constant 0 : index
    %47 = vector.load %arg2[%c0_26, %c3, %c0_27, %c0_28] : memref<1x8x64x32xf32, #tpu.memory_space<vmem>>, vector<1x1x64x32xf32>
    %48 = vector.shape_cast %47 : vector<1x1x64x32xf32> to vector<64x32xf32>
    %49 = vector.shape_cast %15 : vector<1x32xi1> to vector<1x32xi1>
    %50 = vector.broadcast %49 : vector<1x32xi1> to vector<64x32xi1>
    %51 = arith.select %50, %48, %46 : vector<64x32xi1>, vector<64x32xf32>
    %52 = arith.truncf %51 : vector<64x32xf32> to vector<64x32xbf16>
    %c64 = arith.constant 64 : index
    %c0_29 = arith.constant 0 : index
    %53 = vector.load %arg6[%c64, %c0_29] : memref<512x32xbf16, #tpu.memory_space<vmem>>, vector<64x32xbf16>
    tpu.vector_store %arg6[%c64, %c0_29], %52 {strides = array<i32>} : memref<512x32xbf16, #tpu.memory_space<vmem>>, vector<64x32xbf16>,
    %c0_30 = arith.constant 0 : index
    %c2_31 = arith.constant 2 : index
    %c0_32 = arith.constant 0 : index
    %c0_33 = arith.constant 0 : index
    %54 = vector.load %arg2[%c0_30, %c2_31, %c0_32, %c0_33] : memref<1x8x64x32xf32, #tpu.memory_space<vmem>>, vector<1x1x64x32xf32>
    %55 = vector.shape_cast %54 : vector<1x1x64x32xf32> to vector<64x32xf32>
    %c0_34 = arith.constant 0 : index
    %c3_35 = arith.constant 3 : index
    %c0_36 = arith.constant 0 : index
    %c0_37 = arith.constant 0 : index
    %56 = vector.load %arg2[%c0_34, %c3_35, %c0_36, %c0_37] : memref<1x8x64x32xf32, #tpu.memory_space<vmem>>, vector<1x1x64x32xf32>
    %57 = vector.shape_cast %56 : vector<1x1x64x32xf32> to vector<64x32xf32>
    %58 = vector.shape_cast %5 : vector<1x32xi1> to vector<1x32xi1>
    %59 = vector.broadcast %58 : vector<1x32xi1> to vector<64x32xi1>
    %60 = arith.select %59, %57, %55 : vector<64x32xi1>, vector<64x32xf32>
    %c0_38 = arith.constant 0 : index
    %c1_39 = arith.constant 1 : index
    %c0_40 = arith.constant 0 : index
    %c0_41 = arith.constant 0 : index
    %61 = vector.load %arg2[%c0_38, %c1_39, %c0_40, %c0_41] : memref<1x8x64x32xf32, #tpu.memory_space<vmem>>, vector<1x1x64x32xf32>
    %62 = vector.shape_cast %61 : vector<1x1x64x32xf32> to vector<64x32xf32>
    %63 = vector.shape_cast %10 : vector<1x32xi1> to vector<1x32xi1>
    %64 = vector.broadcast %63 : vector<1x32xi1> to vector<64x32xi1>
    %65 = arith.select %64, %62, %60 : vector<64x32xi1>, vector<64x32xf32>
    %c0_42 = arith.constant 0 : index
    %c4 = arith.constant 4 : index
    %c0_43 = arith.constant 0 : index
    %c0_44 = arith.constant 0 : index
    %66 = vector.load %arg2[%c0_42, %c4, %c0_43, %c0_44] : memref<1x8x64x32xf32, #tpu.memory_space<vmem>>, vector<1x1x64x32xf32>
    %67 = vector.shape_cast %66 : vector<1x1x64x32xf32> to vector<64x32xf32>
    %68 = vector.shape_cast %15 : vector<1x32xi1> to vector<1x32xi1>
    %69 = vector.broadcast %68 : vector<1x32xi1> to vector<64x32xi1>
    %70 = arith.select %69, %67, %65 : vector<64x32xi1>, vector<64x32xf32>
    %c0_45 = arith.constant 0 : index
    %c0_46 = arith.constant 0 : index
    %c0_47 = arith.constant 0 : index
    %c0_48 = arith.constant 0 : index
    %71 = vector.load %arg2[%c0_45, %c0_46, %c0_47, %c0_48] : memref<1x8x64x32xf32, #tpu.memory_space<vmem>>, vector<1x1x64x32xf32>
    %72 = vector.shape_cast %71 : vector<1x1x64x32xf32> to vector<64x32xf32>
    %73 = vector.shape_cast %20 : vector<1x32xi1> to vector<1x32xi1>
    %74 = vector.broadcast %73 : vector<1x32xi1> to vector<64x32xi1>
    %75 = arith.select %74, %72, %70 : vector<64x32xi1>, vector<64x32xf32>
    %76 = arith.truncf %75 : vector<64x32xf32> to vector<64x32xbf16>
    %c128 = arith.constant 128 : index
    %c0_49 = arith.constant 0 : index
    %77 = vector.load %arg6[%c128, %c0_49] : memref<512x32xbf16, #tpu.memory_space<vmem>>, vector<64x32xbf16>
    tpu.vector_store %arg6[%c128, %c0_49], %76 {strides = array<i32>} : memref<512x32xbf16, #tpu.memory_space<vmem>>, vector<64x32xbf16>,
    %c0_50 = arith.constant 0 : index
    %c3_51 = arith.constant 3 : index
    %c0_52 = arith.constant 0 : index
    %c0_53 = arith.constant 0 : index
    %78 = vector.load %arg2[%c0_50, %c3_51, %c0_52, %c0_53] : memref<1x8x64x32xf32, #tpu.memory_space<vmem>>, vector<1x1x64x32xf32>
    %79 = vector.shape_cast %78 : vector<1x1x64x32xf32> to vector<64x32xf32>
    %c0_54 = arith.constant 0 : index
    %c4_55 = arith.constant 4 : index
    %c0_56 = arith.constant 0 : index
    %c0_57 = arith.constant 0 : index
    %80 = vector.load %arg2[%c0_54, %c4_55, %c0_56, %c0_57] : memref<1x8x64x32xf32, #tpu.memory_space<vmem>>, vector<1x1x64x32xf32>
    %81 = vector.shape_cast %80 : vector<1x1x64x32xf32> to vector<64x32xf32>
    %82 = vector.shape_cast %5 : vector<1x32xi1> to vector<1x32xi1>
    %83 = vector.broadcast %82 : vector<1x32xi1> to vector<64x32xi1>
    %84 = arith.select %83, %81, %79 : vector<64x32xi1>, vector<64x32xf32>
    %c0_58 = arith.constant 0 : index
    %c2_59 = arith.constant 2 : index
    %c0_60 = arith.constant 0 : index
    %c0_61 = arith.constant 0 : index
    %85 = vector.load %arg2[%c0_58, %c2_59, %c0_60, %c0_61] : memref<1x8x64x32xf32, #tpu.memory_space<vmem>>, vector<1x1x64x32xf32>
    %86 = vector.shape_cast %85 : vector<1x1x64x32xf32> to vector<64x32xf32>
    %87 = vector.shape_cast %10 : vector<1x32xi1> to vector<1x32xi1>
    %88 = vector.broadcast %87 : vector<1x32xi1> to vector<64x32xi1>
    %89 = arith.select %88, %86, %84 : vector<64x32xi1>, vector<64x32xf32>
    %c0_62 = arith.constant 0 : index
    %c5 = arith.constant 5 : index
    %c0_63 = arith.constant 0 : index
    %c0_64 = arith.constant 0 : index
    %90 = vector.load %arg2[%c0_62, %c5, %c0_63, %c0_64] : memref<1x8x64x32xf32, #tpu.memory_space<vmem>>, vector<1x1x64x32xf32>
    %91 = vector.shape_cast %90 : vector<1x1x64x32xf32> to vector<64x32xf32>
    %92 = vector.shape_cast %15 : vector<1x32xi1> to vector<1x32xi1>
    %93 = vector.broadcast %92 : vector<1x32xi1> to vector<64x32xi1>
    %94 = arith.select %93, %91, %89 : vector<64x32xi1>, vector<64x32xf32>
    %c0_65 = arith.constant 0 : index
    %c1_66 = arith.constant 1 : index
    %c0_67 = arith.constant 0 : index
    %c0_68 = arith.constant 0 : index
    %95 = vector.load %arg2[%c0_65, %c1_66, %c0_67, %c0_68] : memref<1x8x64x32xf32, #tpu.memory_space<vmem>>, vector<1x1x64x32xf32>
    %96 = vector.shape_cast %95 : vector<1x1x64x32xf32> to vector<64x32xf32>
    %97 = vector.shape_cast %20 : vector<1x32xi1> to vector<1x32xi1>
    %98 = vector.broadcast %97 : vector<1x32xi1> to vector<64x32xi1>
    %99 = arith.select %98, %96, %94 : vector<64x32xi1>, vector<64x32xf32>
    %100 = arith.truncf %99 : vector<64x32xf32> to vector<64x32xbf16>
    %c192 = arith.constant 192 : index
    %c0_69 = arith.constant 0 : index
    %101 = vector.load %arg6[%c192, %c0_69] : memref<512x32xbf16, #tpu.memory_space<vmem>>, vector<64x32xbf16>
    tpu.vector_store %arg6[%c192, %c0_69], %100 {strides = array<i32>} : memref<512x32xbf16, #tpu.memory_space<vmem>>, vector<64x32xbf16>,
    %c0_70 = arith.constant 0 : index
    %c4_71 = arith.constant 4 : index
    %c0_72 = arith.constant 0 : index
    %c0_73 = arith.constant 0 : index
    %102 = vector.load %arg2[%c0_70, %c4_71, %c0_72, %c0_73] : memref<1x8x64x32xf32, #tpu.memory_space<vmem>>, vector<1x1x64x32xf32>
    %103 = vector.shape_cast %102 : vector<1x1x64x32xf32> to vector<64x32xf32>
    %c0_74 = arith.constant 0 : index
    %c5_75 = arith.constant 5 : index
    %c0_76 = arith.constant 0 : index
    %c0_77 = arith.constant 0 : index
    %104 = vector.load %arg2[%c0_74, %c5_75, %c0_76, %c0_77] : memref<1x8x64x32xf32, #tpu.memory_space<vmem>>, vector<1x1x64x32xf32>
    %105 = vector.shape_cast %104 : vector<1x1x64x32xf32> to vector<64x32xf32>
    %106 = vector.shape_cast %5 : vector<1x32xi1> to vector<1x32xi1>
    %107 = vector.broadcast %106 : vector<1x32xi1> to vector<64x32xi1>
    %108 = arith.select %107, %105, %103 : vector<64x32xi1>, vector<64x32xf32>
    %c0_78 = arith.constant 0 : index
    %c3_79 = arith.constant 3 : index
    %c0_80 = arith.constant 0 : index
    %c0_81 = arith.constant 0 : index
    %109 = vector.load %arg2[%c0_78, %c3_79, %c0_80, %c0_81] : memref<1x8x64x32xf32, #tpu.memory_space<vmem>>, vector<1x1x64x32xf32>
    %110 = vector.shape_cast %109 : vector<1x1x64x32xf32> to vector<64x32xf32>
    %111 = vector.shape_cast %10 : vector<1x32xi1> to vector<1x32xi1>
    %112 = vector.broadcast %111 : vector<1x32xi1> to vector<64x32xi1>
    %113 = arith.select %112, %110, %108 : vector<64x32xi1>, vector<64x32xf32>
    %c0_82 = arith.constant 0 : index
    %c2_83 = arith.constant 2 : index
    %c0_84 = arith.constant 0 : index
    %c0_85 = arith.constant 0 : index
    %114 = vector.load %arg2[%c0_82, %c2_83, %c0_84, %c0_85] : memref<1x8x64x32xf32, #tpu.memory_space<vmem>>, vector<1x1x64x32xf32>
    %115 = vector.shape_cast %114 : vector<1x1x64x32xf32> to vector<64x32xf32>
    %116 = vector.shape_cast %20 : vector<1x32xi1> to vector<1x32xi1>
    %117 = vector.broadcast %116 : vector<1x32xi1> to vector<64x32xi1>
    %118 = arith.select %117, %115, %113 : vector<64x32xi1>, vector<64x32xf32>
    %119 = arith.truncf %118 : vector<64x32xf32> to vector<64x32xbf16>
    %c256 = arith.constant 256 : index
    %c0_86 = arith.constant 0 : index
    %120 = vector.load %arg6[%c256, %c0_86] : memref<512x32xbf16, #tpu.memory_space<vmem>>, vector<64x32xbf16>
    tpu.vector_store %arg6[%c256, %c0_86], %119 {strides = array<i32>} : memref<512x32xbf16, #tpu.memory_space<vmem>>, vector<64x32xbf16>,
    %c0_87 = arith.constant 0 : index
    %c5_88 = arith.constant 5 : index
    %c0_89 = arith.constant 0 : index
    %c0_90 = arith.constant 0 : index
    %121 = vector.load %arg2[%c0_87, %c5_88, %c0_89, %c0_90] : memref<1x8x64x32xf32, #tpu.memory_space<vmem>>, vector<1x1x64x32xf32>
    %122 = vector.shape_cast %121 : vector<1x1x64x32xf32> to vector<64x32xf32>
    %c0_91 = arith.constant 0 : index
    %c4_92 = arith.constant 4 : index
    %c0_93 = arith.constant 0 : index
    %c0_94 = arith.constant 0 : index
    %123 = vector.load %arg2[%c0_91, %c4_92, %c0_93, %c0_94] : memref<1x8x64x32xf32, #tpu.memory_space<vmem>>, vector<1x1x64x32xf32>
    %124 = vector.shape_cast %123 : vector<1x1x64x32xf32> to vector<64x32xf32>
    %125 = vector.shape_cast %10 : vector<1x32xi1> to vector<1x32xi1>
    %126 = vector.broadcast %125 : vector<1x32xi1> to vector<64x32xi1>
    %127 = arith.select %126, %124, %122 : vector<64x32xi1>, vector<64x32xf32>
    %c0_95 = arith.constant 0 : index
    %c3_96 = arith.constant 3 : index
    %c0_97 = arith.constant 0 : index
    %c0_98 = arith.constant 0 : index
    %128 = vector.load %arg2[%c0_95, %c3_96, %c0_97, %c0_98] : memref<1x8x64x32xf32, #tpu.memory_space<vmem>>, vector<1x1x64x32xf32>
    %129 = vector.shape_cast %128 : vector<1x1x64x32xf32> to vector<64x32xf32>
    %130 = vector.shape_cast %20 : vector<1x32xi1> to vector<1x32xi1>
    %131 = vector.broadcast %130 : vector<1x32xi1> to vector<64x32xi1>
    %132 = arith.select %131, %129, %127 : vector<64x32xi1>, vector<64x32xf32>
    %133 = arith.truncf %132 : vector<64x32xf32> to vector<64x32xbf16>
    %c320 = arith.constant 320 : index
    %c0_99 = arith.constant 0 : index
    %134 = vector.load %arg6[%c320, %c0_99] : memref<512x32xbf16, #tpu.memory_space<vmem>>, vector<64x32xbf16>
    tpu.vector_store %arg6[%c320, %c0_99], %133 {strides = array<i32>} : memref<512x32xbf16, #tpu.memory_space<vmem>>, vector<64x32xbf16>,
    %c0_100 = arith.constant 0 : index
    %c6 = arith.constant 6 : index
    %c0_101 = arith.constant 0 : index
    %c0_102 = arith.constant 0 : index
    %135 = vector.load %arg2[%c0_100, %c6, %c0_101, %c0_102] : memref<1x8x64x32xf32, #tpu.memory_space<vmem>>, vector<1x1x64x32xf32>
    %136 = vector.shape_cast %135 : vector<1x1x64x32xf32> to vector<64x32xf32>
    %137 = arith.truncf %136 : vector<64x32xf32> to vector<64x32xbf16>
    %c384 = arith.constant 384 : index
    %c0_103 = arith.constant 0 : index
    %138 = vector.load %arg6[%c384, %c0_103] : memref<512x32xbf16, #tpu.memory_space<vmem>>, vector<64x32xbf16>
    tpu.vector_store %arg6[%c384, %c0_103], %137 {strides = array<i32>} : memref<512x32xbf16, #tpu.memory_space<vmem>>, vector<64x32xbf16>,
    %c0_104 = arith.constant 0 : index
    %c7 = arith.constant 7 : index
    %c0_105 = arith.constant 0 : index
    %c0_106 = arith.constant 0 : index
    %139 = vector.load %arg2[%c0_104, %c7, %c0_105, %c0_106] : memref<1x8x64x32xf32, #tpu.memory_space<vmem>>, vector<1x1x64x32xf32>
    %140 = vector.shape_cast %139 : vector<1x1x64x32xf32> to vector<64x32xf32>
    %141 = arith.truncf %140 : vector<64x32xf32> to vector<64x32xbf16>
    %c448 = arith.constant 448 : index
    %c0_107 = arith.constant 0 : index
    %142 = vector.load %arg6[%c448, %c0_107] : memref<512x32xbf16, #tpu.memory_space<vmem>>, vector<64x32xbf16>
    tpu.vector_store %arg6[%c448, %c0_107], %141 {strides = array<i32>} : memref<512x32xbf16, #tpu.memory_space<vmem>>, vector<64x32xbf16>,
    %c0_108 = arith.constant 0 : index
    %c0_109 = arith.constant 0 : index
    %143 = vector.load %arg3[%c0_108, %c0_109] : memref<32x48xbf16, #tpu.memory_space<vmem>>, vector<32x48xbf16>
    %c0_110 = arith.constant 0 : index
    %c0_111 = arith.constant 0 : index
    %144 = vector.load %arg4[%c0_110, %c0_111] : memref<1x48xf32, #tpu.memory_space<vmem>>, vector<1x48xf32>
    %c0_112 = arith.constant 0 : index
    %c0_113 = arith.constant 0 : index
    %145 = vector.load %arg6[%c0_112, %c0_113] : memref<512x32xbf16, #tpu.memory_space<vmem>>, vector<128x32xbf16>
    %cst = arith.constant dense<0.000000e+00> : vector<128x48xf32>
    %146 = tpu.matmul %145, %143, %cst {dimension_numbers = #tpu.dot_dimension_numbers<[1], [0], [0], [1], [0, 0, 1, 1], [], []>} : vector<128x32xbf16>, vector<32x48xbf16>, vector<128x48xf32> -> vector<128x48xf32>
    %147 = vector.broadcast %144 : vector<1x48xf32> to vector<128x48xf32>
    %148 = arith.addf %146, %147 : vector<128x48xf32>
    %149 = vector.extract_strided_slice %148 {offsets = [0, 0], sizes = [64, 48], strides = [1, 1]} : vector<128x48xf32> to vector<64x48xf32>
    %c0_114 = arith.constant 0 : index
    %c0_115 = arith.constant 0 : index
    %c0_116 = arith.constant 0 : index
    %c0_117 = arith.constant 0 : index
    %150 = vector.load %arg5[%c0_114, %c0_115, %c0_116, %c0_117] : memref<1x8x64x48xf32, #tpu.memory_space<vmem>>, vector<1x1x64x48xf32>
    %151 = vector.shape_cast %150 : vector<1x1x64x48xf32> to vector<64x48xf32>
    %152 = vector.shape_cast %149 : vector<64x48xf32> to vector<1x1x64x48xf32>
    tpu.vector_store %arg5[%c0_114, %c0_115, %c0_116, %c0_117], %152 {strides = array<i32>} : memref<1x8x64x48xf32, #tpu.memory_space<vmem>>, vector<1x1x64x48xf32>,
    %153 = vector.extract_strided_slice %148 {offsets = [64, 0], sizes = [64, 48], strides = [1, 1]} : vector<128x48xf32> to vector<64x48xf32>
    %c0_118 = arith.constant 0 : index
    %c1_119 = arith.constant 1 : index
    %c0_120 = arith.constant 0 : index
    %c0_121 = arith.constant 0 : index
    %154 = vector.load %arg5[%c0_118, %c1_119, %c0_120, %c0_121] : memref<1x8x64x48xf32, #tpu.memory_space<vmem>>, vector<1x1x64x48xf32>
    %155 = vector.shape_cast %154 : vector<1x1x64x48xf32> to vector<64x48xf32>
    %156 = vector.shape_cast %153 : vector<64x48xf32> to vector<1x1x64x48xf32>
    tpu.vector_store %arg5[%c0_118, %c1_119, %c0_120, %c0_121], %156 {strides = array<i32>} : memref<1x8x64x48xf32, #tpu.memory_space<vmem>>, vector<1x1x64x48xf32>,
    %c128_122 = arith.constant 128 : index
    %c0_123 = arith.constant 0 : index
    %157 = vector.load %arg6[%c128_122, %c0_123] : memref<512x32xbf16, #tpu.memory_space<vmem>>, vector<128x32xbf16>
    %cst_124 = arith.constant dense<0.000000e+00> : vector<128x48xf32>
    %158 = tpu.matmul %157, %143, %cst_124 {dimension_numbers = #tpu.dot_dimension_numbers<[1], [0], [0], [1], [0, 0, 1, 1], [], []>} : vector<128x32xbf16>, vector<32x48xbf16>, vector<128x48xf32> -> vector<128x48xf32>
    %159 = vector.broadcast %144 : vector<1x48xf32> to vector<128x48xf32>
    %160 = arith.addf %158, %159 : vector<128x48xf32>
    %161 = vector.extract_strided_slice %160 {offsets = [0, 0], sizes = [64, 48], strides = [1, 1]} : vector<128x48xf32> to vector<64x48xf32>
    %c0_125 = arith.constant 0 : index
    %c2_126 = arith.constant 2 : index
    %c0_127 = arith.constant 0 : index
    %c0_128 = arith.constant 0 : index
    %162 = vector.load %arg5[%c0_125, %c2_126, %c0_127, %c0_128] : memref<1x8x64x48xf32, #tpu.memory_space<vmem>>, vector<1x1x64x48xf32>
    %163 = vector.shape_cast %162 : vector<1x1x64x48xf32> to vector<64x48xf32>
    %164 = vector.shape_cast %161 : vector<64x48xf32> to vector<1x1x64x48xf32>
    tpu.vector_store %arg5[%c0_125, %c2_126, %c0_127, %c0_128], %164 {strides = array<i32>} : memref<1x8x64x48xf32, #tpu.memory_space<vmem>>, vector<1x1x64x48xf32>,
    %165 = vector.extract_strided_slice %160 {offsets = [64, 0], sizes = [64, 48], strides = [1, 1]} : vector<128x48xf32> to vector<64x48xf32>
    %c0_129 = arith.constant 0 : index
    %c3_130 = arith.constant 3 : index
    %c0_131 = arith.constant 0 : index
    %c0_132 = arith.constant 0 : index
    %166 = vector.load %arg5[%c0_129, %c3_130, %c0_131, %c0_132] : memref<1x8x64x48xf32, #tpu.memory_space<vmem>>, vector<1x1x64x48xf32>
    %167 = vector.shape_cast %166 : vector<1x1x64x48xf32> to vector<64x48xf32>
    %168 = vector.shape_cast %165 : vector<64x48xf32> to vector<1x1x64x48xf32>
    tpu.vector_store %arg5[%c0_129, %c3_130, %c0_131, %c0_132], %168 {strides = array<i32>} : memref<1x8x64x48xf32, #tpu.memory_space<vmem>>, vector<1x1x64x48xf32>,
    %c256_133 = arith.constant 256 : index
    %c0_134 = arith.constant 0 : index
    %169 = vector.load %arg6[%c256_133, %c0_134] : memref<512x32xbf16, #tpu.memory_space<vmem>>, vector<128x32xbf16>
    %cst_135 = arith.constant dense<0.000000e+00> : vector<128x48xf32>
    %170 = tpu.matmul %169, %143, %cst_135 {dimension_numbers = #tpu.dot_dimension_numbers<[1], [0], [0], [1], [0, 0, 1, 1], [], []>} : vector<128x32xbf16>, vector<32x48xbf16>, vector<128x48xf32> -> vector<128x48xf32>
    %171 = vector.broadcast %144 : vector<1x48xf32> to vector<128x48xf32>
    %172 = arith.addf %170, %171 : vector<128x48xf32>
    %173 = vector.extract_strided_slice %172 {offsets = [0, 0], sizes = [64, 48], strides = [1, 1]} : vector<128x48xf32> to vector<64x48xf32>
    %c0_136 = arith.constant 0 : index
    %c4_137 = arith.constant 4 : index
    %c0_138 = arith.constant 0 : index
    %c0_139 = arith.constant 0 : index
    %174 = vector.load %arg5[%c0_136, %c4_137, %c0_138, %c0_139] : memref<1x8x64x48xf32, #tpu.memory_space<vmem>>, vector<1x1x64x48xf32>
    %175 = vector.shape_cast %174 : vector<1x1x64x48xf32> to vector<64x48xf32>
    %176 = vector.shape_cast %173 : vector<64x48xf32> to vector<1x1x64x48xf32>
    tpu.vector_store %arg5[%c0_136, %c4_137, %c0_138, %c0_139], %176 {strides = array<i32>} : memref<1x8x64x48xf32, #tpu.memory_space<vmem>>, vector<1x1x64x48xf32>,
    %177 = vector.extract_strided_slice %172 {offsets = [64, 0], sizes = [64, 48], strides = [1, 1]} : vector<128x48xf32> to vector<64x48xf32>
    %c0_140 = arith.constant 0 : index
    %c5_141 = arith.constant 5 : index
    %c0_142 = arith.constant 0 : index
    %c0_143 = arith.constant 0 : index
    %178 = vector.load %arg5[%c0_140, %c5_141, %c0_142, %c0_143] : memref<1x8x64x48xf32, #tpu.memory_space<vmem>>, vector<1x1x64x48xf32>
    %179 = vector.shape_cast %178 : vector<1x1x64x48xf32> to vector<64x48xf32>
    %180 = vector.shape_cast %177 : vector<64x48xf32> to vector<1x1x64x48xf32>
    tpu.vector_store %arg5[%c0_140, %c5_141, %c0_142, %c0_143], %180 {strides = array<i32>} : memref<1x8x64x48xf32, #tpu.memory_space<vmem>>, vector<1x1x64x48xf32>,
    %c384_144 = arith.constant 384 : index
    %c0_145 = arith.constant 0 : index
    %181 = vector.load %arg6[%c384_144, %c0_145] : memref<512x32xbf16, #tpu.memory_space<vmem>>, vector<128x32xbf16>
    %cst_146 = arith.constant dense<0.000000e+00> : vector<128x48xf32>
    %182 = tpu.matmul %181, %143, %cst_146 {dimension_numbers = #tpu.dot_dimension_numbers<[1], [0], [0], [1], [0, 0, 1, 1], [], []>} : vector<128x32xbf16>, vector<32x48xbf16>, vector<128x48xf32> -> vector<128x48xf32>
    %183 = vector.broadcast %144 : vector<1x48xf32> to vector<128x48xf32>
    %184 = arith.addf %182, %183 : vector<128x48xf32>
    %185 = vector.extract_strided_slice %184 {offsets = [0, 0], sizes = [64, 48], strides = [1, 1]} : vector<128x48xf32> to vector<64x48xf32>
    %c0_147 = arith.constant 0 : index
    %c6_148 = arith.constant 6 : index
    %c0_149 = arith.constant 0 : index
    %c0_150 = arith.constant 0 : index
    %186 = vector.load %arg5[%c0_147, %c6_148, %c0_149, %c0_150] : memref<1x8x64x48xf32, #tpu.memory_space<vmem>>, vector<1x1x64x48xf32>
    %187 = vector.shape_cast %186 : vector<1x1x64x48xf32> to vector<64x48xf32>
    %188 = vector.shape_cast %185 : vector<64x48xf32> to vector<1x1x64x48xf32>
    tpu.vector_store %arg5[%c0_147, %c6_148, %c0_149, %c0_150], %188 {strides = array<i32>} : memref<1x8x64x48xf32, #tpu.memory_space<vmem>>, vector<1x1x64x48xf32>,
    %189 = vector.extract_strided_slice %184 {offsets = [64, 0], sizes = [64, 48], strides = [1, 1]} : vector<128x48xf32> to vector<64x48xf32>
    %c0_151 = arith.constant 0 : index
    %c7_152 = arith.constant 7 : index
    %c0_153 = arith.constant 0 : index
    %c0_154 = arith.constant 0 : index
    %190 = vector.load %arg5[%c0_151, %c7_152, %c0_153, %c0_154] : memref<1x8x64x48xf32, #tpu.memory_space<vmem>>, vector<1x1x64x48xf32>
    %191 = vector.shape_cast %190 : vector<1x1x64x48xf32> to vector<64x48xf32>
    %192 = vector.shape_cast %189 : vector<64x48xf32> to vector<1x1x64x48xf32>
    tpu.vector_store %arg5[%c0_151, %c7_152, %c0_153, %c0_154], %192 {strides = array<i32>} : memref<1x8x64x48xf32, #tpu.memory_space<vmem>>, vector<1x1x64x48xf32>,
    return
  }
  func.func @transform_0(%arg0: i32, %arg1: i32) -> (i32, i32, i32, i32) {
    %c0_i32 = arith.constant 0 : i32
    %c0_i32_0 = arith.constant 0 : i32
    %c0_i32_1 = arith.constant 0 : i32
    return %arg0, %c0_i32, %arg1, %c0_i32_0 : i32, i32, i32, i32
  }
  func.func @transform_1(%arg0: i32, %arg1: i32) -> (i32, i32) {
    %c0_i32 = arith.constant 0 : i32
    %c0_i32_0 = arith.constant 0 : i32
    %c0_i32_1 = arith.constant 0 : i32
    return %c0_i32, %c0_i32_0 : i32, i32
  }
  func.func @transform_2(%arg0: i32, %arg1: i32) -> (i32, i32) {
    %c0_i32 = arith.constant 0 : i32
    %c0_i32_0 = arith.constant 0 : i32
    %c0_i32_1 = arith.constant 0 : i32
    return %c0_i32, %c0_i32_0 : i32, i32
  }
  func.func @transform_3(%arg0: i32, %arg1: i32) -> (i32, i32, i32, i32) {
    %c0_i32 = arith.constant 0 : i32
    %c0_i32_0 = arith.constant 0 : i32
    %c0_i32_1 = arith.constant 0 : i32
    return %arg0, %c0_i32, %arg1, %c0_i32_0 : i32, i32, i32, i32
  }
}

</mosaic_0001>

<llo_original>
// kernel: tpu_custom_call.1
$region0: #{tpu_custom_call.1}
  #allocation0 [shape = 'u32[]', space=smem, size = 0x4, offset = 0x4, fixed_abs, tag = 'smem constant byte address 0x4 - core index']
  #allocation1 [shape = 'u32[144,128]{1,0:T(1,128)}', space=vmem, size = 0x12000, scoped, tag = 'internal scratch']
  #allocation2 [shape = 'bf16[512,32]{1,0:T(8,128)(2,1)}', space=vmem, size = 0x20000, scoped, tag = 'scratch operand']
  %s0 = inlined_call_operand.vmem [shape: f32[2,8,64,32], index: 0, kind: input, shape index: {}]
  %s1 = inlined_call_operand.vmem [shape: bf16[32,48], index: 1, kind: input, shape index: {}]
  %s2 = inlined_call_operand.vmem [shape: f32[1,48], index: 2, kind: input, shape index: {}]
  %s3 = inlined_call_operand.vmem [shape: f32[2,8,64,48], index: 3, kind: output, shape index: {}]
  %s4 = sld [smem:[#allocation0]]
  $region45: #{tpu_custom_call.1} parent=0
    _
  %s6 = ssub.s32 1, %s4
  %s7 = scalar_select 0, %s6, %s4
  loop: start=0, step=1, limit=4
  $region2: #{tpu_custom_call.1} parent=0 // loop_pre_header
    _
  $region3: #{tpu_custom_call.1} parent=0 // loop_header
    %s9 = sphi 0, %s13
    %p10 = scmp.ge.s32.totalorder %s9, 4
    %s16 = sphi 0, %s28
    %s17 = sphi 0, %s24
    %s18 = sphi 0, %s16
    %s19 = sphi 0, %s17
    %s20 = sphi 0, %s18
    %s21 = sphi 0, %s19
    %s33 = sphi 0, %s35
    %s36 = sphi 0, %s33
    %s37 = sphi 0, %s36
    %s53 = sphi 0, %s37
    %s57 = sphi 0, %s57
    %s59 = sphi 0, %s57
    %s60 = sphi 0, %s59
    %s74 = sphi 0, %s60
    %s78 = sphi 0, %s78
    %s80 = sphi 0, %s78
    %s81 = sphi 0, %s80
    %s95 = sphi 0, %s81
    %s103 = sphi 0, %s105
    %s106 = sphi 0, %s103
    %s107 = sphi 0, %s106
    %s123 = sphi 0, %s107
  $region4: #{tpu_custom_call.1} parent=0 // loop_header_branch
    %12 = sbr.rel (%p10) target = $region8
  $region5: #{tpu_custom_call.1} parent=0 // loop_body
    %s14 = ssub.s32 %s9, 1
    %s15 = ssub.s32 %s9, 2
    %s22 = sadd.s32 1, %s17
    %p23 = scmp.ge.s32.totalorder %s22, 1
    %s24 = scalar_select %p23, 0, %s22
    %s25 = sadd.s32 1, %s16
    %s26 = scalar_select %p23, %s25, %s16
    %p27 = scmp.ge.s32.totalorder %s26, 2
    %s28 = scalar_select %p27, 0, %s26
    %s29 = ssub.s32 %s16, %s28
    %s30 = ssub.s32 %s17, %s24
    %s31 = sor.u32 %s29, %s30
    %p32 = scmp.eq.s32.totalorder %s31, 0
    %s34 = sadd.s32 %s33, 1
    %s35 = scalar_select %p32, %s33, %s34
    %p38 = pneg %p32
    %p39 = scmp.eq.s32.totalorder %s9, 1
    %p40 = por %p38, %p39
    %p41 = scmp.ne.s32.totalorder %s33, %s36
    %p42 = scmp.eq.s32.totalorder %s9, 0
    %p43 = por %p41, %p42
    %p44 = scmp.ne.s32.totalorder %s33, %s36
    %p45 = scmp.eq.s32.totalorder %s14, 1
    %p46 = por %p44, %p45
    %p47 = scmp.ne.s32.totalorder %s36, %s37
    %p48 = scmp.eq.s32.totalorder %s14, 0
    %p49 = por %p47, %p48
    %p50 = scmp.ne.s32.totalorder %s36, %s37
    %p51 = scmp.eq.s32.totalorder %s15, 1
    %p52 = por %p50, %p51
    %p54 = scmp.ne.s32.totalorder %s37, %s53
    %p55 = scmp.eq.s32.totalorder %s15, 0
    %p56 = por %p54, %p55
    %s58 = sadd.s32 %s57, 1
    %p61 = scmp.eq.s32.totalorder %s9, 1
    %p62 = scmp.ne.s32.totalorder %s57, %s59
    %p63 = scmp.eq.s32.totalorder %s9, 0
    %p64 = por %p62, %p63
    %p65 = scmp.ne.s32.totalorder %s57, %s59
    %p66 = scmp.eq.s32.totalorder %s14, 1
    %p67 = por %p65, %p66
    %p68 = scmp.ne.s32.totalorder %s59, %s60
    %p69 = scmp.eq.s32.totalorder %s14, 0
    %p70 = por %p68, %p69
    %p71 = scmp.ne.s32.totalorder %s59, %s60
    %p72 = scmp.eq.s32.totalorder %s15, 1
    %p73 = por %p71, %p72
    %p75 = scmp.ne.s32.totalorder %s60, %s74
    %p76 = scmp.eq.s32.totalorder %s15, 0
    %p77 = por %p75, %p76
    %s79 = sadd.s32 %s78, 1
    %p82 = scmp.eq.s32.totalorder %s9, 1
    %p83 = scmp.ne.s32.totalorder %s78, %s80
    %p84 = scmp.eq.s32.totalorder %s9, 0
    %p85 = por %p83, %p84
    %p86 = scmp.ne.s32.totalorder %s78, %s80
    %p87 = scmp.eq.s32.totalorder %s14, 1
    %p88 = por %p86, %p87
    %p89 = scmp.ne.s32.totalorder %s80, %s81
    %p90 = scmp.eq.s32.totalorder %s14, 0
    %p91 = por %p89, %p90
    %p92 = scmp.ne.s32.totalorder %s80, %s81
    %p93 = scmp.eq.s32.totalorder %s15, 1
    %p94 = por %p92, %p93
    %p96 = scmp.ne.s32.totalorder %s81, %s95
    %p97 = scmp.eq.s32.totalorder %s15, 0
    %p98 = por %p96, %p97
    %s99 = ssub.s32 %s16, %s28
    %s100 = ssub.s32 %s17, %s24
    %s101 = sor.u32 %s99, %s100
    %p102 = scmp.eq.s32.totalorder %s101, 0
    %s104 = sadd.s32 %s103, 1
    %s105 = scalar_select %p102, %s103, %s104
    %p108 = pneg %p102
    %p109 = scmp.eq.s32.totalorder %s9, 1
    %p110 = por %p108, %p109
    %p111 = scmp.ne.s32.totalorder %s103, %s106
    %p112 = scmp.eq.s32.totalorder %s9, 0
    %p113 = por %p111, %p112
    %p114 = scmp.ne.s32.totalorder %s103, %s106
    %p115 = scmp.eq.s32.totalorder %s14, 1
    %p116 = por %p114, %p115
    %p117 = scmp.ne.s32.totalorder %s106, %s107
    %p118 = scmp.eq.s32.totalorder %s14, 0
    %p119 = por %p117, %p118
    %p120 = scmp.ne.s32.totalorder %s106, %s107
    %p121 = scmp.eq.s32.totalorder %s15, 1
    %p122 = por %p120, %p121
    %p124 = scmp.ne.s32.totalorder %s107, %s123
    %p125 = scmp.eq.s32.totalorder %s15, 0
    %p126 = por %p124, %p125
    %p127 = scmp.le.s32.totalorder 1, %s9
    %p128 = scmp.lt.s32.totalorder %s9, 3
    %p129 = pnand %p127, %p128
    %p130 = pneg %p129
    // Predicated region
    $region9: #{tpu_custom_call.1} parent=5 // pred_check
      _
    $region10: #{tpu_custom_call.1} parent=5 // pred_check_branch
      %132 = sbr.rel (%p129) target = $region12
    $region11: #{tpu_custom_call.1} parent=5 // pred_region
      %s133 = ssub.s32 %s9, 1
      // Predicated region
      $region13: #{tpu_custom_call.1} parent=11 // pred_check
        %p134 = pneg %p70
      $region14: #{tpu_custom_call.1} parent=11 // pred_check_branch
        %136 = sbr.rel (%p134) target = $region16
      $region15: #{tpu_custom_call.1} parent=11 // pred_region
        _
      $region16: #{tpu_custom_call.1} parent=11 // pred_fallthru
        _
      // Predicated region
      $region17: #{tpu_custom_call.1} parent=11 // pred_check
        %p137 = pneg %p91
      $region18: #{tpu_custom_call.1} parent=11 // pred_check_branch
        %139 = sbr.rel (%p137) target = $region20
      $region19: #{tpu_custom_call.1} parent=11 // pred_region
        _
      $region20: #{tpu_custom_call.1} parent=11 // pred_fallthru
        _
    $region12: #{tpu_custom_call.1} parent=5 // pred_fallthru
      _
    %p140 = scmp.lt.s32.totalorder %s9, 2
    // Predicated region
    $region21: #{tpu_custom_call.1} parent=5 // pred_check
      %p141 = pneg %p140
    $region22: #{tpu_custom_call.1} parent=5 // pred_check_branch
      %143 = sbr.rel (%p141) target = $region24
    $region23: #{tpu_custom_call.1} parent=5 // pred_region
      // Predicated region
      $region25: #{tpu_custom_call.1} parent=23 // pred_check
        %p144 = pneg %p43
      $region26: #{tpu_custom_call.1} parent=23 // pred_check_branch
        %146 = sbr.rel (%p144) target = $region28
      $region27: #{tpu_custom_call.1} parent=23 // pred_region
        %s147 = smul.u32 8, %s17
        %p148 = scmp.lt.s32.totalorder %s16, 1
        %s149 = scalar_select %p148, %s16, 1
        %p150 = scmp.lt.s32.totalorder %s147, 7
        %s151 = scalar_select %p150, %s147, 7
        %s152 = smul.addr %s149, 64
        %s153 = sadd.s32 %s151, %s152
        %s154 = smul.addr %s153, 8
        %s155 = scalar_lea.vmem %s0, %s154
        %s156 = smul.u32 8, %s17
      $region28: #{tpu_custom_call.1} parent=23 // pred_fallthru
        _
    $region24: #{tpu_custom_call.1} parent=5 // pred_fallthru
      _
    %p157 = scmp.le.s32.totalorder 1, %s9
    %p158 = scmp.lt.s32.totalorder %s9, 3
    %p159 = pnand %p157, %p158
    %p160 = pneg %p159
    // Predicated region
    $region29: #{tpu_custom_call.1} parent=5 // pred_check
      _
    $region30: #{tpu_custom_call.1} parent=5 // pred_check_branch
      %162 = sbr.rel (%p159) target = $region32
    $region31: #{tpu_custom_call.1} parent=5 // pred_region
      %s163 = ssub.s32 %s9, 1
      %s164 = smul.u32 8, %s19
      %p165 = scmp.lt.s32.totalorder %s18, 1
      %s166 = scalar_select %p165, %s18, 1
      %p167 = scmp.lt.s32.totalorder %s164, 7
      %s168 = scalar_select %p167, %s164, 7
      %s169 = smul.addr %s166, 64
      %s170 = sadd.s32 %s168, %s169
      %s171 = smul.addr %s170, 8
      %s172 = scalar_lea.vmem %s0, %s171
      %p173 = pneg %p49
      %p174 = pneg %p46
      %p175 = pneg %p70
      %p176 = pneg %p67
      %p177 = pneg %p91
      %p178 = pneg %p88
      %p179 = pneg %p119
      %p180 = pneg %p116
      %s181 = smul.u32 8, %s19
      %p182 = scmp.lt.s32.totalorder %s18, 1
      %s183 = scalar_select %p182, %s18, 1
      %p184 = scmp.lt.s32.totalorder %s181, 7
      %s185 = scalar_select %p184, %s181, 7
      %s186 = smul.addr %s183, 64
      %s187 = sadd.s32 %s185, %s186
      %s188 = smul.addr %s187, 8
      %s189 = scalar_lea.vmem %s3, %s188
      %s190 = smul.u32 8, %s19
      %p191 = scmp.lt.s32.totalorder %s18, 1
      %s192 = scalar_select %p191, %s18, 1
      %p193 = scmp.lt.s32.totalorder %s190, 7
      %s194 = scalar_select %p193, %s190, 7
      %s195 = smul.addr %s192, 64
      %s196 = sadd.s32 %s194, %s195
      %s197 = smul.addr %s196, 8
      %s198 = scalar_lea.vmem %s0, %s197
      %s199 = smul.u32 8, %s19
      %s200 = smul.u32 8, %s19
      %p201 = scmp.lt.s32.totalorder %s18, 1
      %s202 = scalar_select %p201, %s18, 1
      %p203 = scmp.lt.s32.totalorder %s200, 7
      %s204 = scalar_select %p203, %s200, 7
      %s205 = smul.addr %s202, 64
      %s206 = sadd.s32 %s204, %s205
      %s207 = smul.addr %s206, 8
      %s208 = scalar_lea.vmem %s3, %s207
      %s209 = smul.u32 8, %s19
      %v211 = vlaneseq
      %v212 = vand.u32 %v211, 127
      %vm213 = vcmp.ge.s32.totalorder %v212, 0
      %vm214 = vcmp.lt.s32.totalorder %v212, 2
      %vm215 = vmand %vm213, %vm214
      %vm216 = vcmp.ge.s32.totalorder %v212, 2
      %vm217 = vcmp.lt.s32.totalorder %v212, 4
      %vm218 = vmand %vm216, %vm217
      %vm219 = vcmp.ge.s32.totalorder %v212, 4
      %vm220 = vcmp.lt.s32.totalorder %v212, 6
      %vm221 = vmand %vm219, %vm220
      %vm222 = vcmp.ge.s32.totalorder %v212, 6
      %vm223 = vcmp.lt.s32.totalorder %v212, 8
      %vm224 = vmand %vm222, %vm223
      %v225 = vld [vmem:[%s198] sm:$0xff]
      %v226 = vld [vmem:[%s198 + $0x8] sm:$0xff]
      %v227 = vld [vmem:[%s198 + $0x10] sm:$0xff]
      %v228 = vld [vmem:[%s198 + $0x18] sm:$0xff]
      %v229 = vld [vmem:[%s198 + $0x20] sm:$0xff]
      %v230 = vld [vmem:[%s198 + $0x28] sm:$0xff]
      %v231 = vld [vmem:[%s198 + $0x30] sm:$0xff]
      %v232 = vld [vmem:[%s198 + $0x38] sm:$0xff]
      %s233 = scalar_lea.vmem %s198, 64
      %v234 = vld [vmem:[%s233] sm:$0xff]
      %v235 = vld [vmem:[%s233 + $0x8] sm:$0xff]
      %v236 = vld [vmem:[%s233 + $0x10] sm:$0xff]
      %v237 = vld [vmem:[%s233 + $0x18] sm:$0xff]
      %v238 = vld [vmem:[%s233 + $0x20] sm:$0xff]
      %v239 = vld [vmem:[%s233 + $0x28] sm:$0xff]
      %v240 = vld [vmem:[%s233 + $0x30] sm:$0xff]
      %v241 = vld [vmem:[%s233 + $0x38] sm:$0xff]
      %v242 = vsel %vm215, 1, 0
      %vm243 = vcmp.eq.s32.totalorder %v242, 1
      %v244 = vsel %vm243, %v234, %v225
      %v245 = vsel %vm243, %v235, %v226
      %v246 = vsel %vm243, %v236, %v227
      %v247 = vsel %vm243, %v237, %v228
      %v248 = vsel %vm243, %v238, %v229
      %v249 = vsel %vm243, %v239, %v230
      %v250 = vsel %vm243, %v240, %v231
      %v251 = vsel %vm243, %v241, %v232
      %s252 = scalar_lea.vmem %s198, 128
      %v253 = vld [vmem:[%s252] sm:$0xff]
      %v254 = vld [vmem:[%s252 + $0x8] sm:$0xff]
      %v255 = vld [vmem:[%s252 + $0x10] sm:$0xff]
      %v256 = vld [vmem:[%s252 + $0x18] sm:$0xff]
      %v257 = vld [vmem:[%s252 + $0x20] sm:$0xff]
      %v258 = vld [vmem:[%s252 + $0x28] sm:$0xff]
      %v259 = vld [vmem:[%s252 + $0x30] sm:$0xff]
      %v260 = vld [vmem:[%s252 + $0x38] sm:$0xff]
      %v261 = vsel %vm221, 1, 0
      %vm262 = vcmp.eq.s32.totalorder %v261, 1
      %v263 = vsel %vm262, %v253, %v244
      %v264 = vsel %vm262, %v254, %v245
      %v265 = vsel %vm262, %v255, %v246
      %v266 = vsel %vm262, %v256, %v247
      %v267 = vsel %vm262, %v257, %v248
      %v268 = vsel %vm262, %v258, %v249
      %v269 = vsel %vm262, %v259, %v250
      %v270 = vsel %vm262, %v260, %v251
      %v271 = vpack.c.bf16 %v264, %v263
      %v272 = vpack.c.bf16 %v266, %v265
      %v273 = vpack.c.bf16 %v268, %v267
      %v274 = vpack.c.bf16 %v270, %v269
      %v279 = vunpack.c.l.b16 %v271
      %v280 = vunpack.c.h.b16 %v271
      %v281 = vunpack.c.l.b16 %v272
      %v282 = vunpack.c.h.b16 %v272
      %v283 = vunpack.c.l.b16 %v273
      %v284 = vunpack.c.h.b16 %v273
      %v285 = vunpack.c.l.b16 %v274
      %v286 = vunpack.c.h.b16 %v274
      %v287 = vpack.c.b16 %v279, %v279
      %v288 = vpack.c.b16 %v280, %v280
      %v289 = vpack.c.b16 %v281, %v281
      %v290 = vpack.c.b16 %v282, %v282
      %v291 = vpack.c.b16 %v283, %v283
      %v292 = vpack.c.b16 %v284, %v284
      %v293 = vpack.c.b16 %v285, %v285
      %v294 = vpack.c.b16 %v286, %v286
      %vm303 = vcmask 257024
      %304 = vst.msk [vmem:[#allocation2] sm:$0xf] %vm303, %v287
      %305 = vst.msk [vmem:[#allocation2 + $0x4] sm:$0xf] %vm303, %v288
      %306 = vst.msk [vmem:[#allocation2 + $0x8] sm:$0xf] %vm303, %v289
      %307 = vst.msk [vmem:[#allocation2 + $0xc] sm:$0xf] %vm303, %v290
      %308 = vst.msk [vmem:[#allocation2 + $0x10] sm:$0xf] %vm303, %v291
      %309 = vst.msk [vmem:[#allocation2 + $0x14] sm:$0xf] %vm303, %v292
      %310 = vst.msk [vmem:[#allocation2 + $0x18] sm:$0xf] %vm303, %v293
      %311 = vst.msk [vmem:[#allocation2 + $0x1c] sm:$0xf] %vm303, %v294
      %v312 = vld [vmem:[%s233] sm:$0xff]
      %v313 = vld [vmem:[%s233 + $0x8] sm:$0xff]
      %v314 = vld [vmem:[%s233 + $0x10] sm:$0xff]
      %v315 = vld [vmem:[%s233 + $0x18] sm:$0xff]
      %v316 = vld [vmem:[%s233 + $0x20] sm:$0xff]
      %v317 = vld [vmem:[%s233 + $0x28] sm:$0xff]
      %v318 = vld [vmem:[%s233 + $0x30] sm:$0xff]
      %v319 = vld [vmem:[%s233 + $0x38] sm:$0xff]
      %v320 = vld [vmem:[%s252] sm:$0xff]
      %v321 = vld [vmem:[%s252 + $0x8] sm:$0xff]
      %v322 = vld [vmem:[%s252 + $0x10] sm:$0xff]
      %v323 = vld [vmem:[%s252 + $0x18] sm:$0xff]
      %v324 = vld [vmem:[%s252 + $0x20] sm:$0xff]
      %v325 = vld [vmem:[%s252 + $0x28] sm:$0xff]
      %v326 = vld [vmem:[%s252 + $0x30] sm:$0xff]
      %v327 = vld [vmem:[%s252 + $0x38] sm:$0xff]
      %v328 = vsel %vm243, %v320, %v312
      %v329 = vsel %vm243, %v321, %v313
      %v330 = vsel %vm243, %v322, %v314
      %v331 = vsel %vm243, %v323, %v315
      %v332 = vsel %vm243, %v324, %v316
      %v333 = vsel %vm243, %v325, %v317
      %v334 = vsel %vm243, %v326, %v318
      %v335 = vsel %vm243, %v327, %v319
      %v336 = vld [vmem:[%s198] sm:$0xff]
      %v337 = vld [vmem:[%s198 + $0x8] sm:$0xff]
      %v338 = vld [vmem:[%s198 + $0x10] sm:$0xff]
      %v339 = vld [vmem:[%s198 + $0x18] sm:$0xff]
      %v340 = vld [vmem:[%s198 + $0x20] sm:$0xff]
      %v341 = vld [vmem:[%s198 + $0x28] sm:$0xff]
      %v342 = vld [vmem:[%s198 + $0x30] sm:$0xff]
      %v343 = vld [vmem:[%s198 + $0x38] sm:$0xff]
      %v344 = vsel %vm218, 1, 0
      %vm345 = vcmp.eq.s32.totalorder %v344, 1
      %v346 = vsel %vm345, %v336, %v328
      %v347 = vsel %vm345, %v337, %v329
      %v348 = vsel %vm345, %v338, %v330
      %v349 = vsel %vm345, %v339, %v331
      %v350 = vsel %vm345, %v340, %v332
      %v351 = vsel %vm345, %v341, %v333
      %v352 = vsel %vm345, %v342, %v334
      %v353 = vsel %vm345, %v343, %v335
      %s354 = scalar_lea.vmem %s198, 192
      %v355 = vld [vmem:[%s354] sm:$0xff]
      %v356 = vld [vmem:[%s354 + $0x8] sm:$0xff]
      %v357 = vld [vmem:[%s354 + $0x10] sm:$0xff]
      %v358 = vld [vmem:[%s354 + $0x18] sm:$0xff]
      %v359 = vld [vmem:[%s354 + $0x20] sm:$0xff]
      %v360 = vld [vmem:[%s354 + $0x28] sm:$0xff]
      %v361 = vld [vmem:[%s354 + $0x30] sm:$0xff]
      %v362 = vld [vmem:[%s354 + $0x38] sm:$0xff]
      %v363 = vsel %vm262, %v355, %v346
      %v364 = vsel %vm262, %v356, %v347
      %v365 = vsel %vm262, %v357, %v348
      %v366 = vsel %vm262, %v358, %v349
      %v367 = vsel %vm262, %v359, %v350
      %v368 = vsel %vm262, %v360, %v351
      %v369 = vsel %vm262, %v361, %v352
      %v370 = vsel %vm262, %v362, %v353
      %v371 = vpack.c.bf16 %v364, %v363
      %v372 = vpack.c.bf16 %v366, %v365
      %v373 = vpack.c.bf16 %v368, %v367
      %v374 = vpack.c.bf16 %v370, %v369
      %v379 = vunpack.c.l.b16 %v371
      %v380 = vunpack.c.h.b16 %v371
      %v381 = vunpack.c.l.b16 %v372
      %v382 = vunpack.c.h.b16 %v372
      %v383 = vunpack.c.l.b16 %v373
      %v384 = vunpack.c.h.b16 %v373
      %v385 = vunpack.c.l.b16 %v374
      %v386 = vunpack.c.h.b16 %v374
      %v387 = vpack.c.b16 %v379, %v379
      %v388 = vpack.c.b16 %v380, %v380
      %v389 = vpack.c.b16 %v381, %v381
      %v390 = vpack.c.b16 %v382, %v382
      %v391 = vpack.c.b16 %v383, %v383
      %v392 = vpack.c.b16 %v384, %v384
      %v393 = vpack.c.b16 %v385, %v385
      %v394 = vpack.c.b16 %v386, %v386
      %403 = vst.msk [vmem:[#allocation2 + $0x20] sm:$0xf] %vm303, %v387
      %404 = vst.msk [vmem:[#allocation2 + $0x24] sm:$0xf] %vm303, %v388
      %405 = vst.msk [vmem:[#allocation2 + $0x28] sm:$0xf] %vm303, %v389
      %406 = vst.msk [vmem:[#allocation2 + $0x2c] sm:$0xf] %vm303, %v390
      %407 = vst.msk [vmem:[#allocation2 + $0x30] sm:$0xf] %vm303, %v391
      %408 = vst.msk [vmem:[#allocation2 + $0x34] sm:$0xf] %vm303, %v392
      %409 = vst.msk [vmem:[#allocation2 + $0x38] sm:$0xf] %vm303, %v393
      %410 = vst.msk [vmem:[#allocation2 + $0x3c] sm:$0xf] %vm303, %v394
      %v411 = vld [vmem:[%s252] sm:$0xff]
      %v412 = vld [vmem:[%s252 + $0x8] sm:$0xff]
      %v413 = vld [vmem:[%s252 + $0x10] sm:$0xff]
      %v414 = vld [vmem:[%s252 + $0x18] sm:$0xff]
      %v415 = vld [vmem:[%s252 + $0x20] sm:$0xff]
      %v416 = vld [vmem:[%s252 + $0x28] sm:$0xff]
      %v417 = vld [vmem:[%s252 + $0x30] sm:$0xff]
      %v418 = vld [vmem:[%s252 + $0x38] sm:$0xff]
      %v419 = vld [vmem:[%s354] sm:$0xff]
      %v420 = vld [vmem:[%s354 + $0x8] sm:$0xff]
      %v421 = vld [vmem:[%s354 + $0x10] sm:$0xff]
      %v422 = vld [vmem:[%s354 + $0x18] sm:$0xff]
      %v423 = vld [vmem:[%s354 + $0x20] sm:$0xff]
      %v424 = vld [vmem:[%s354 + $0x28] sm:$0xff]
      %v425 = vld [vmem:[%s354 + $0x30] sm:$0xff]
      %v426 = vld [vmem:[%s354 + $0x38] sm:$0xff]
      %v427 = vsel %vm243, %v419, %v411
      %v428 = vsel %vm243, %v420, %v412
      %v429 = vsel %vm243, %v421, %v413
      %v430 = vsel %vm243, %v422, %v414
      %v431 = vsel %vm243, %v423, %v415
      %v432 = vsel %vm243, %v424, %v416
      %v433 = vsel %vm243, %v425, %v417
      %v434 = vsel %vm243, %v426, %v418
      %v435 = vld [vmem:[%s233] sm:$0xff]
      %v436 = vld [vmem:[%s233 + $0x8] sm:$0xff]
      %v437 = vld [vmem:[%s233 + $0x10] sm:$0xff]
      %v438 = vld [vmem:[%s233 + $0x18] sm:$0xff]
      %v439 = vld [vmem:[%s233 + $0x20] sm:$0xff]
      %v440 = vld [vmem:[%s233 + $0x28] sm:$0xff]
      %v441 = vld [vmem:[%s233 + $0x30] sm:$0xff]
      %v442 = vld [vmem:[%s233 + $0x38] sm:$0xff]
      %v443 = vsel %vm345, %v435, %v427
      %v444 = vsel %vm345, %v436, %v428
      %v445 = vsel %vm345, %v437, %v429
      %v446 = vsel %vm345, %v438, %v430
      %v447 = vsel %vm345, %v439, %v431
      %v448 = vsel %vm345, %v440, %v432
      %v449 = vsel %vm345, %v441, %v433
      %v450 = vsel %vm345, %v442, %v434
      %s451 = scalar_lea.vmem %s198, 256
      %v452 = vld [vmem:[%s451] sm:$0xff]
      %v453 = vld [vmem:[%s451 + $0x8] sm:$0xff]
      %v454 = vld [vmem:[%s451 + $0x10] sm:$0xff]
      %v455 = vld [vmem:[%s451 + $0x18] sm:$0xff]
      %v456 = vld [vmem:[%s451 + $0x20] sm:$0xff]
      %v457 = vld [vmem:[%s451 + $0x28] sm:$0xff]
      %v458 = vld [vmem:[%s451 + $0x30] sm:$0xff]
      %v459 = vld [vmem:[%s451 + $0x38] sm:$0xff]
      %v460 = vsel %vm262, %v452, %v443
      %v461 = vsel %vm262, %v453, %v444
      %v462 = vsel %vm262, %v454, %v445
      %v463 = vsel %vm262, %v455, %v446
      %v464 = vsel %vm262, %v456, %v447
      %v465 = vsel %vm262, %v457, %v448
      %v466 = vsel %vm262, %v458, %v449
      %v467 = vsel %vm262, %v459, %v450
      %v468 = vld [vmem:[%s198] sm:$0xff]
      %v469 = vld [vmem:[%s198 + $0x8] sm:$0xff]
      %v470 = vld [vmem:[%s198 + $0x10] sm:$0xff]
      %v471 = vld [vmem:[%s198 + $0x18] sm:$0xff]
      %v472 = vld [vmem:[%s198 + $0x20] sm:$0xff]
      %v473 = vld [vmem:[%s198 + $0x28] sm:$0xff]
      %v474 = vld [vmem:[%s198 + $0x30] sm:$0xff]
      %v475 = vld [vmem:[%s198 + $0x38] sm:$0xff]
      %v476 = vsel %vm224, 1, 0
      %vm477 = vcmp.eq.s32.totalorder %v476, 1
      %v478 = vsel %vm477, %v468, %v460
      %v479 = vsel %vm477, %v469, %v461
      %v480 = vsel %vm477, %v470, %v462
      %v481 = vsel %vm477, %v471, %v463
      %v482 = vsel %vm477, %v472, %v464
      %v483 = vsel %vm477, %v473, %v465
      %v484 = vsel %vm477, %v474, %v466
      %v485 = vsel %vm477, %v475, %v467
      %v486 = vpack.c.bf16 %v479, %v478
      %v487 = vpack.c.bf16 %v481, %v480
      %v488 = vpack.c.bf16 %v483, %v482
      %v489 = vpack.c.bf16 %v485, %v484
      %v494 = vunpack.c.l.b16 %v486
      %v495 = vunpack.c.h.b16 %v486
      %v496 = vunpack.c.l.b16 %v487
      %v497 = vunpack.c.h.b16 %v487
      %v498 = vunpack.c.l.b16 %v488
      %v499 = vunpack.c.h.b16 %v488
      %v500 = vunpack.c.l.b16 %v489
      %v501 = vunpack.c.h.b16 %v489
      %v502 = vpack.c.b16 %v494, %v494
      %v503 = vpack.c.b16 %v495, %v495
      %v504 = vpack.c.b16 %v496, %v496
      %v505 = vpack.c.b16 %v497, %v497
      %v506 = vpack.c.b16 %v498, %v498
      %v507 = vpack.c.b16 %v499, %v499
      %v508 = vpack.c.b16 %v500, %v500
      %v509 = vpack.c.b16 %v501, %v501
      %518 = vst.msk [vmem:[#allocation2 + $0x40] sm:$0xf] %vm303, %v502
      %519 = vst.msk [vmem:[#allocation2 + $0x44] sm:$0xf] %vm303, %v503
      %520 = vst.msk [vmem:[#allocation2 + $0x48] sm:$0xf] %vm303, %v504
      %521 = vst.msk [vmem:[#allocation2 + $0x4c] sm:$0xf] %vm303, %v505
      %522 = vst.msk [vmem:[#allocation2 + $0x50] sm:$0xf] %vm303, %v506
      %523 = vst.msk [vmem:[#allocation2 + $0x54] sm:$0xf] %vm303, %v507
      %524 = vst.msk [vmem:[#allocation2 + $0x58] sm:$0xf] %vm303, %v508
      %525 = vst.msk [vmem:[#allocation2 + $0x5c] sm:$0xf] %vm303, %v509
      %v526 = vld [vmem:[%s354] sm:$0xff]
      %v527 = vld [vmem:[%s354 + $0x8] sm:$0xff]
      %v528 = vld [vmem:[%s354 + $0x10] sm:$0xff]
      %v529 = vld [vmem:[%s354 + $0x18] sm:$0xff]
      %v530 = vld [vmem:[%s354 + $0x20] sm:$0xff]
      %v531 = vld [vmem:[%s354 + $0x28] sm:$0xff]
      %v532 = vld [vmem:[%s354 + $0x30] sm:$0xff]
      %v533 = vld [vmem:[%s354 + $0x38] sm:$0xff]
      %v534 = vld [vmem:[%s451] sm:$0xff]
      %v535 = vld [vmem:[%s451 + $0x8] sm:$0xff]
      %v536 = vld [vmem:[%s451 + $0x10] sm:$0xff]
      %v537 = vld [vmem:[%s451 + $0x18] sm:$0xff]
      %v538 = vld [vmem:[%s451 + $0x20] sm:$0xff]
      %v539 = vld [vmem:[%s451 + $0x28] sm:$0xff]
      %v540 = vld [vmem:[%s451 + $0x30] sm:$0xff]
      %v541 = vld [vmem:[%s451 + $0x38] sm:$0xff]
      %v542 = vsel %vm243, %v534, %v526
      %v543 = vsel %vm243, %v535, %v527
      %v544 = vsel %vm243, %v536, %v528
      %v545 = vsel %vm243, %v537, %v529
      %v546 = vsel %vm243, %v538, %v530
      %v547 = vsel %vm243, %v539, %v531
      %v548 = vsel %vm243, %v540, %v532
      %v549 = vsel %vm243, %v541, %v533
      %v550 = vld [vmem:[%s252] sm:$0xff]
      %v551 = vld [vmem:[%s252 + $0x8] sm:$0xff]
      %v552 = vld [vmem:[%s252 + $0x10] sm:$0xff]
      %v553 = vld [vmem:[%s252 + $0x18] sm:$0xff]
      %v554 = vld [vmem:[%s252 + $0x20] sm:$0xff]
      %v555 = vld [vmem:[%s252 + $0x28] sm:$0xff]
      %v556 = vld [vmem:[%s252 + $0x30] sm:$0xff]
      %v557 = vld [vmem:[%s252 + $0x38] sm:$0xff]
      %v558 = vsel %vm345, %v550, %v542
      %v559 = vsel %vm345, %v551, %v543
      %v560 = vsel %vm345, %v552, %v544
      %v561 = vsel %vm345, %v553, %v545
      %v562 = vsel %vm345, %v554, %v546
      %v563 = vsel %vm345, %v555, %v547
      %v564 = vsel %vm345, %v556, %v548
      %v565 = vsel %vm345, %v557, %v549
      %s566 = scalar_lea.vmem %s198, 320
      %v567 = vld [vmem:[%s566] sm:$0xff]
      %v568 = vld [vmem:[%s566 + $0x8] sm:$0xff]
      %v569 = vld [vmem:[%s566 + $0x10] sm:$0xff]
      %v570 = vld [vmem:[%s566 + $0x18] sm:$0xff]
      %v571 = vld [vmem:[%s566 + $0x20] sm:$0xff]
      %v572 = vld [vmem:[%s566 + $0x28] sm:$0xff]
      %v573 = vld [vmem:[%s566 + $0x30] sm:$0xff]
      %v574 = vld [vmem:[%s566 + $0x38] sm:$0xff]
      %v575 = vsel %vm262, %v567, %v558
      %v576 = vsel %vm262, %v568, %v559
      %v577 = vsel %vm262, %v569, %v560
      %v578 = vsel %vm262, %v570, %v561
      %v579 = vsel %vm262, %v571, %v562
      %v580 = vsel %vm262, %v572, %v563
      %v581 = vsel %vm262, %v573, %v564
      %v582 = vsel %vm262, %v574, %v565
      %v583 = vld [vmem:[%s233] sm:$0xff]
      %v584 = vld [vmem:[%s233 + $0x8] sm:$0xff]
      %v585 = vld [vmem:[%s233 + $0x10] sm:$0xff]
      %v586 = vld [vmem:[%s233 + $0x18] sm:$0xff]
      %v587 = vld [vmem:[%s233 + $0x20] sm:$0xff]
      %v588 = vld [vmem:[%s233 + $0x28] sm:$0xff]
      %v589 = vld [vmem:[%s233 + $0x30] sm:$0xff]
      %v590 = vld [vmem:[%s233 + $0x38] sm:$0xff]
      %v591 = vsel %vm477, %v583, %v575
      %v592 = vsel %vm477, %v584, %v576
      %v593 = vsel %vm477, %v585, %v577
      %v594 = vsel %vm477, %v586, %v578
      %v595 = vsel %vm477, %v587, %v579
      %v596 = vsel %vm477, %v588, %v580
      %v597 = vsel %vm477, %v589, %v581
      %v598 = vsel %vm477, %v590, %v582
      %v599 = vpack.c.bf16 %v592, %v591
      %v600 = vpack.c.bf16 %v594, %v593
      %v601 = vpack.c.bf16 %v596, %v595
      %v602 = vpack.c.bf16 %v598, %v597
      %v607 = vunpack.c.l.b16 %v599
      %v608 = vunpack.c.h.b16 %v599
      %v609 = vunpack.c.l.b16 %v600
      %v610 = vunpack.c.h.b16 %v600
      %v611 = vunpack.c.l.b16 %v601
      %v612 = vunpack.c.h.b16 %v601
      %v613 = vunpack.c.l.b16 %v602
      %v614 = vunpack.c.h.b16 %v602
      %v615 = vpack.c.b16 %v607, %v607
      %v616 = vpack.c.b16 %v608, %v608
      %v617 = vpack.c.b16 %v609, %v609
      %v618 = vpack.c.b16 %v610, %v610
      %v619 = vpack.c.b16 %v611, %v611
      %v620 = vpack.c.b16 %v612, %v612
      %v621 = vpack.c.b16 %v613, %v613
      %v622 = vpack.c.b16 %v614, %v614
      %631 = vst.msk [vmem:[#allocation2 + $0x60] sm:$0xf] %vm303, %v615
      %632 = vst.msk [vmem:[#allocation2 + $0x64] sm:$0xf] %vm303, %v616
      %633 = vst.msk [vmem:[#allocation2 + $0x68] sm:$0xf] %vm303, %v617
      %634 = vst.msk [vmem:[#allocation2 + $0x6c] sm:$0xf] %vm303, %v618
      %635 = vst.msk [vmem:[#allocation2 + $0x70] sm:$0xf] %vm303, %v619
      %636 = vst.msk [vmem:[#allocation2 + $0x74] sm:$0xf] %vm303, %v620
      %637 = vst.msk [vmem:[#allocation2 + $0x78] sm:$0xf] %vm303, %v621
      %638 = vst.msk [vmem:[#allocation2 + $0x7c] sm:$0xf] %vm303, %v622
      %v639 = vld [vmem:[%s451] sm:$0xff]
      %v640 = vld [vmem:[%s451 + $0x8] sm:$0xff]
      %v641 = vld [vmem:[%s451 + $0x10] sm:$0xff]
      %v642 = vld [vmem:[%s451 + $0x18] sm:$0xff]
      %v643 = vld [vmem:[%s451 + $0x20] sm:$0xff]
      %v644 = vld [vmem:[%s451 + $0x28] sm:$0xff]
      %v645 = vld [vmem:[%s451 + $0x30] sm:$0xff]
      %v646 = vld [vmem:[%s451 + $0x38] sm:$0xff]
      %v647 = vld [vmem:[%s566] sm:$0xff]
      %v648 = vld [vmem:[%s566 + $0x8] sm:$0xff]
      %v649 = vld [vmem:[%s566 + $0x10] sm:$0xff]
      %v650 = vld [vmem:[%s566 + $0x18] sm:$0xff]
      %v651 = vld [vmem:[%s566 + $0x20] sm:$0xff]
      %v652 = vld [vmem:[%s566 + $0x28] sm:$0xff]
      %v653 = vld [vmem:[%s566 + $0x30] sm:$0xff]
      %v654 = vld [vmem:[%s566 + $0x38] sm:$0xff]
      %v655 = vsel %vm243, %v647, %v639
      %v656 = vsel %vm243, %v648, %v640
      %v657 = vsel %vm243, %v649, %v641
      %v658 = vsel %vm243, %v650, %v642
      %v659 = vsel %vm243, %v651, %v643
      %v660 = vsel %vm243, %v652, %v644
      %v661 = vsel %vm243, %v653, %v645
      %v662 = vsel %vm243, %v654, %v646
      %v663 = vld [vmem:[%s354] sm:$0xff]
      %v664 = vld [vmem:[%s354 + $0x8] sm:$0xff]
      %v665 = vld [vmem:[%s354 + $0x10] sm:$0xff]
      %v666 = vld [vmem:[%s354 + $0x18] sm:$0xff]
      %v667 = vld [vmem:[%s354 + $0x20] sm:$0xff]
      %v668 = vld [vmem:[%s354 + $0x28] sm:$0xff]
      %v669 = vld [vmem:[%s354 + $0x30] sm:$0xff]
      %v670 = vld [vmem:[%s354 + $0x38] sm:$0xff]
      %v671 = vsel %vm345, %v663, %v655
      %v672 = vsel %vm345, %v664, %v656
      %v673 = vsel %vm345, %v665, %v657
      %v674 = vsel %vm345, %v666, %v658
      %v675 = vsel %vm345, %v667, %v659
      %v676 = vsel %vm345, %v668, %v660
      %v677 = vsel %vm345, %v669, %v661
      %v678 = vsel %vm345, %v670, %v662
      %v679 = vld [vmem:[%s252] sm:$0xff]
      %v680 = vld [vmem:[%s252 + $0x8] sm:$0xff]
      %v681 = vld [vmem:[%s252 + $0x10] sm:$0xff]
      %v682 = vld [vmem:[%s252 + $0x18] sm:$0xff]
      %v683 = vld [vmem:[%s252 + $0x20] sm:$0xff]
      %v684 = vld [vmem:[%s252 + $0x28] sm:$0xff]
      %v685 = vld [vmem:[%s252 + $0x30] sm:$0xff]
      %v686 = vld [vmem:[%s252 + $0x38] sm:$0xff]
      %v687 = vsel %vm477, %v679, %v671
      %v688 = vsel %vm477, %v680, %v672
      %v689 = vsel %vm477, %v681, %v673
      %v690 = vsel %vm477, %v682, %v674
      %v691 = vsel %vm477, %v683, %v675
      %v692 = vsel %vm477, %v684, %v676
      %v693 = vsel %vm477, %v685, %v677
      %v694 = vsel %vm477, %v686, %v678
      %v695 = vpack.c.bf16 %v688, %v687
      %v696 = vpack.c.bf16 %v690, %v689
      %v697 = vpack.c.bf16 %v692, %v691
      %v698 = vpack.c.bf16 %v694, %v693
      %v703 = vunpack.c.l.b16 %v695
      %v704 = vunpack.c.h.b16 %v695
      %v705 = vunpack.c.l.b16 %v696
      %v706 = vunpack.c.h.b16 %v696
      %v707 = vunpack.c.l.b16 %v697
      %v708 = vunpack.c.h.b16 %v697
      %v709 = vunpack.c.l.b16 %v698
      %v710 = vunpack.c.h.b16 %v698
      %v711 = vpack.c.b16 %v703, %v703
      %v712 = vpack.c.b16 %v704, %v704
      %v713 = vpack.c.b16 %v705, %v705
      %v714 = vpack.c.b16 %v706, %v706
      %v715 = vpack.c.b16 %v707, %v707
      %v716 = vpack.c.b16 %v708, %v708
      %v717 = vpack.c.b16 %v709, %v709
      %v718 = vpack.c.b16 %v710, %v710
      %727 = vst.msk [vmem:[#allocation2 + $0x80] sm:$0xf] %vm303, %v711
      %728 = vst.msk [vmem:[#allocation2 + $0x84] sm:$0xf] %vm303, %v712
      %729 = vst.msk [vmem:[#allocation2 + $0x88] sm:$0xf] %vm303, %v713
      %730 = vst.msk [vmem:[#allocation2 + $0x8c] sm:$0xf] %vm303, %v714
      %731 = vst.msk [vmem:[#allocation2 + $0x90] sm:$0xf] %vm303, %v715
      %732 = vst.msk [vmem:[#allocation2 + $0x94] sm:$0xf] %vm303, %v716
      %733 = vst.msk [vmem:[#allocation2 + $0x98] sm:$0xf] %vm303, %v717
      %734 = vst.msk [vmem:[#allocation2 + $0x9c] sm:$0xf] %vm303, %v718
      %v735 = vld [vmem:[%s566] sm:$0xff]
      %v736 = vld [vmem:[%s566 + $0x8] sm:$0xff]
      %v737 = vld [vmem:[%s566 + $0x10] sm:$0xff]
      %v738 = vld [vmem:[%s566 + $0x18] sm:$0xff]
      %v739 = vld [vmem:[%s566 + $0x20] sm:$0xff]
      %v740 = vld [vmem:[%s566 + $0x28] sm:$0xff]
      %v741 = vld [vmem:[%s566 + $0x30] sm:$0xff]
      %v742 = vld [vmem:[%s566 + $0x38] sm:$0xff]
      %v743 = vld [vmem:[%s451] sm:$0xff]
      %v744 = vld [vmem:[%s451 + $0x8] sm:$0xff]
      %v745 = vld [vmem:[%s451 + $0x10] sm:$0xff]
      %v746 = vld [vmem:[%s451 + $0x18] sm:$0xff]
      %v747 = vld [vmem:[%s451 + $0x20] sm:$0xff]
      %v748 = vld [vmem:[%s451 + $0x28] sm:$0xff]
      %v749 = vld [vmem:[%s451 + $0x30] sm:$0xff]
      %v750 = vld [vmem:[%s451 + $0x38] sm:$0xff]
      %v751 = vsel %vm345, %v743, %v735
      %v752 = vsel %vm345, %v744, %v736
      %v753 = vsel %vm345, %v745, %v737
      %v754 = vsel %vm345, %v746, %v738
      %v755 = vsel %vm345, %v747, %v739
      %v756 = vsel %vm345, %v748, %v740
      %v757 = vsel %vm345, %v749, %v741
      %v758 = vsel %vm345, %v750, %v742
      %v759 = vld [vmem:[%s354] sm:$0xff]
      %v760 = vld [vmem:[%s354 + $0x8] sm:$0xff]
      %v761 = vld [vmem:[%s354 + $0x10] sm:$0xff]
      %v762 = vld [vmem:[%s354 + $0x18] sm:$0xff]
      %v763 = vld [vmem:[%s354 + $0x20] sm:$0xff]
      %v764 = vld [vmem:[%s354 + $0x28] sm:$0xff]
      %v765 = vld [vmem:[%s354 + $0x30] sm:$0xff]
      %v766 = vld [vmem:[%s354 + $0x38] sm:$0xff]
      %v767 = vsel %vm477, %v759, %v751
      %v768 = vsel %vm477, %v760, %v752
      %v769 = vsel %vm477, %v761, %v753
      %v770 = vsel %vm477, %v762, %v754
      %v771 = vsel %vm477, %v763, %v755
      %v772 = vsel %vm477, %v764, %v756
      %v773 = vsel %vm477, %v765, %v757
      %v774 = vsel %vm477, %v766, %v758
      %v775 = vpack.c.bf16 %v768, %v767
      %v776 = vpack.c.bf16 %v770, %v769
      %v777 = vpack.c.bf16 %v772, %v771
      %v778 = vpack.c.bf16 %v774, %v773
      %v783 = vunpack.c.l.b16 %v775
      %v784 = vunpack.c.h.b16 %v775
      %v785 = vunpack.c.l.b16 %v776
      %v786 = vunpack.c.h.b16 %v776
      %v787 = vunpack.c.l.b16 %v777
      %v788 = vunpack.c.h.b16 %v777
      %v789 = vunpack.c.l.b16 %v778
      %v790 = vunpack.c.h.b16 %v778
      %v791 = vpack.c.b16 %v783, %v783
      %v792 = vpack.c.b16 %v784, %v784
      %v793 = vpack.c.b16 %v785, %v785
      %v794 = vpack.c.b16 %v786, %v786
      %v795 = vpack.c.b16 %v787, %v787
      %v796 = vpack.c.b16 %v788, %v788
      %v797 = vpack.c.b16 %v789, %v789
      %v798 = vpack.c.b16 %v790, %v790
      %807 = vst.msk [vmem:[#allocation2 + $0xa0] sm:$0xf] %vm303, %v791
      %808 = vst.msk [vmem:[#allocation2 + $0xa4] sm:$0xf] %vm303, %v792
      %809 = vst.msk [vmem:[#allocation2 + $0xa8] sm:$0xf] %vm303, %v793
      %810 = vst.msk [vmem:[#allocation2 + $0xac] sm:$0xf] %vm303, %v794
      %811 = vst.msk [vmem:[#allocation2 + $0xb0] sm:$0xf] %vm303, %v795
      %812 = vst.msk [vmem:[#allocation2 + $0xb4] sm:$0xf] %vm303, %v796
      %813 = vst.msk [vmem:[#allocation2 + $0xb8] sm:$0xf] %vm303, %v797
      %814 = vst.msk [vmem:[#allocation2 + $0xbc] sm:$0xf] %vm303, %v798
      %s815 = scalar_lea.vmem %s198, 384
      %v816 = vld [vmem:[%s815] sm:$0xff]
      %v817 = vld [vmem:[%s815 + $0x8] sm:$0xff]
      %v818 = vld [vmem:[%s815 + $0x10] sm:$0xff]
      %v819 = vld [vmem:[%s815 + $0x18] sm:$0xff]
      %v820 = vld [vmem:[%s815 + $0x20] sm:$0xff]
      %v821 = vld [vmem:[%s815 + $0x28] sm:$0xff]
      %v822 = vld [vmem:[%s815 + $0x30] sm:$0xff]
      %v823 = vld [vmem:[%s815 + $0x38] sm:$0xff]
      %v824 = vpack.c.bf16 %v817, %v816
      %v825 = vpack.c.bf16 %v819, %v818
      %v826 = vpack.c.bf16 %v821, %v820
      %v827 = vpack.c.bf16 %v823, %v822
      %v832 = vunpack.c.l.b16 %v824
      %v833 = vunpack.c.h.b16 %v824
      %v834 = vunpack.c.l.b16 %v825
      %v835 = vunpack.c.h.b16 %v825
      %v836 = vunpack.c.l.b16 %v826
      %v837 = vunpack.c.h.b16 %v826
      %v838 = vunpack.c.l.b16 %v827
      %v839 = vunpack.c.h.b16 %v827
      %v840 = vpack.c.b16 %v832, %v832
      %v841 = vpack.c.b16 %v833, %v833
      %v842 = vpack.c.b16 %v834, %v834
      %v843 = vpack.c.b16 %v835, %v835
      %v844 = vpack.c.b16 %v836, %v836
      %v845 = vpack.c.b16 %v837, %v837
      %v846 = vpack.c.b16 %v838, %v838
      %v847 = vpack.c.b16 %v839, %v839
      %856 = vst.msk [vmem:[#allocation2 + $0xc0] sm:$0xf] %vm303, %v840
      %857 = vst.msk [vmem:[#allocation2 + $0xc4] sm:$0xf] %vm303, %v841
      %858 = vst.msk [vmem:[#allocation2 + $0xc8] sm:$0xf] %vm303, %v842
      %859 = vst.msk [vmem:[#allocation2 + $0xcc] sm:$0xf] %vm303, %v843
      %860 = vst.msk [vmem:[#allocation2 + $0xd0] sm:$0xf] %vm303, %v844
      %861 = vst.msk [vmem:[#allocation2 + $0xd4] sm:$0xf] %vm303, %v845
      %862 = vst.msk [vmem:[#allocation2 + $0xd8] sm:$0xf] %vm303, %v846
      %863 = vst.msk [vmem:[#allocation2 + $0xdc] sm:$0xf] %vm303, %v847
      %s864 = scalar_lea.vmem %s198, 448
      %v865 = vld [vmem:[%s864] sm:$0xff]
      %v866 = vld [vmem:[%s864 + $0x8] sm:$0xff]
      %v867 = vld [vmem:[%s864 + $0x10] sm:$0xff]
      %v868 = vld [vmem:[%s864 + $0x18] sm:$0xff]
      %v869 = vld [vmem:[%s864 + $0x20] sm:$0xff]
      %v870 = vld [vmem:[%s864 + $0x28] sm:$0xff]
      %v871 = vld [vmem:[%s864 + $0x30] sm:$0xff]
      %v872 = vld [vmem:[%s864 + $0x38] sm:$0xff]
      %v873 = vpack.c.bf16 %v866, %v865
      %v874 = vpack.c.bf16 %v868, %v867
      %v875 = vpack.c.bf16 %v870, %v869
      %v876 = vpack.c.bf16 %v872, %v871
      %v881 = vunpack.c.l.b16 %v873
      %v882 = vunpack.c.h.b16 %v873
      %v883 = vunpack.c.l.b16 %v874
      %v884 = vunpack.c.h.b16 %v874
      %v885 = vunpack.c.l.b16 %v875
      %v886 = vunpack.c.h.b16 %v875
      %v887 = vunpack.c.l.b16 %v876
      %v888 = vunpack.c.h.b16 %v876
      %v889 = vpack.c.b16 %v881, %v881
      %v890 = vpack.c.b16 %v882, %v882
      %v891 = vpack.c.b16 %v883, %v883
      %v892 = vpack.c.b16 %v884, %v884
      %v893 = vpack.c.b16 %v885, %v885
      %v894 = vpack.c.b16 %v886, %v886
      %v895 = vpack.c.b16 %v887, %v887
      %v896 = vpack.c.b16 %v888, %v888
      %905 = vst.msk [vmem:[#allocation2 + $0xe0] sm:$0xf] %vm303, %v889
      %906 = vst.msk [vmem:[#allocation2 + $0xe4] sm:$0xf] %vm303, %v890
      %907 = vst.msk [vmem:[#allocation2 + $0xe8] sm:$0xf] %vm303, %v891
      %908 = vst.msk [vmem:[#allocation2 + $0xec] sm:$0xf] %vm303, %v892
      %909 = vst.msk [vmem:[#allocation2 + $0xf0] sm:$0xf] %vm303, %v893
      %910 = vst.msk [vmem:[#allocation2 + $0xf4] sm:$0xf] %vm303, %v894
      %911 = vst.msk [vmem:[#allocation2 + $0xf8] sm:$0xf] %vm303, %v895
      %912 = vst.msk [vmem:[#allocation2 + $0xfc] sm:$0xf] %vm303, %v896
      %v913 = vld [vmem:[%s1] sm:$0xf]
      %v914 = vld [vmem:[%s1 + $0x4] sm:$0xf]
      %v915 = vld [vmem:[%s1 + $0x8] sm:$0xf]
      %v916 = vld [vmem:[%s1 + $0xc] sm:$0xf]
      %v917 = vld [vmem:[%s2] sm:$0x1]
      %v918 = vld [vmem:[#allocation2] sm:$0xf]
      %v919 = vld [vmem:[#allocation2 + $0x4] sm:$0xf]
      %v920 = vld [vmem:[#allocation2 + $0x8] sm:$0xf]
      %v921 = vld [vmem:[#allocation2 + $0xc] sm:$0xf]
      %v922 = vld [vmem:[#allocation2 + $0x10] sm:$0xf]
      %v923 = vld [vmem:[#allocation2 + $0x14] sm:$0xf]
      %v924 = vld [vmem:[#allocation2 + $0x18] sm:$0xf]
      %v925 = vld [vmem:[#allocation2 + $0x1c] sm:$0xf]
      %v926 = vld [vmem:[#allocation2 + $0x20] sm:$0xf]
      %v927 = vld [vmem:[#allocation2 + $0x24] sm:$0xf]
      %v928 = vld [vmem:[#allocation2 + $0x28] sm:$0xf]
      %v929 = vld [vmem:[#allocation2 + $0x2c] sm:$0xf]
      %v930 = vld [vmem:[#allocation2 + $0x30] sm:$0xf]
      %v931 = vld [vmem:[#allocation2 + $0x34] sm:$0xf]
      %v932 = vld [vmem:[#allocation2 + $0x38] sm:$0xf]
      %v933 = vld [vmem:[#allocation2 + $0x3c] sm:$0xf]
      %v935 = vlaneseq
      %v936 = vshrl.u32 %v935, 7
      %v937 = vsub.s32 0, %v936
      %v938 = vrot.slane %v917, %v937
      %v956 = vunpack.c.l.b16 %v918
      %v957 = vunpack.c.l.b16 %v919
      %v958 = vunpack.c.l.b16 %v920
      %v959 = vunpack.c.l.b16 %v921
      %v960 = vunpack.c.l.b16 %v922
      %v961 = vunpack.c.l.b16 %v923
      %v962 = vunpack.c.l.b16 %v924
      %v963 = vunpack.c.l.b16 %v925
      %v964 = vunpack.c.l.b16 %v926
      %v965 = vunpack.c.l.b16 %v927
      %v966 = vunpack.c.l.b16 %v928
      %v967 = vunpack.c.l.b16 %v929
      %v968 = vunpack.c.l.b16 %v930
      %v969 = vunpack.c.l.b16 %v931
      %v970 = vunpack.c.l.b16 %v932
      %v971 = vunpack.c.l.b16 %v933
      %v972 = vpack.c.b16 %v957, %v956
      %v973 = vpack.c.b16 %v959, %v958
      %v974 = vpack.c.b16 %v961, %v960
      %v975 = vpack.c.b16 %v963, %v962
      %v976 = vpack.c.b16 %v965, %v964
      %v977 = vpack.c.b16 %v967, %v966
      %v978 = vpack.c.b16 %v969, %v968
      %v979 = vpack.c.b16 %v971, %v970
      %v984 = vunpack.c.l.b16 %v913
      %v985 = vunpack.c.l.b16 %v914
      %v986 = vunpack.c.l.b16 %v915
      %v987 = vunpack.c.l.b16 %v916
      %v988 = vpack.c.b16 %v985, %v984
      %v989 = vpack.c.b16 %v987, %v986
      %vm992 = vcmask 261120
      %v994 = vsel %vm992, %v972, 0
      %v997 = vsel %vm992, %v973, 0
      %v1000 = vsel %vm992, %v974, 0
      %v1003 = vsel %vm992, %v975, 0
      %v1006 = vsel %vm992, %v976, 0
      %v1009 = vsel %vm992, %v977, 0
      %v1012 = vsel %vm992, %v978, 0
      %v1015 = vsel %vm992, %v979, 0
      %1017 = vmatprep.subr.bf16.mxu0 0
      %1018 = vmatpush1.bf16.msra.mxu0 0
      %1019 = vmatprep.subr.bf16.mxu0 0
      %1020 = vmatpush1.bf16.msra.mxu0 0
      %1021 = vmatprep.subr.bf16.mxu0 0
      %1022 = vmatpush1.bf16.msra.mxu0 0
      %1023 = vmatprep.subr.bf16.mxu0 0
      %1024 = vmatpush1.bf16.msra.mxu0 0
      %1025 = vmatprep.subr.bf16.mxu0 0
      %1026 = vmatpush1.bf16.msra.mxu0 0
      %1027 = vmatprep.subr.bf16.mxu0 0
      %1028 = vmatpush1.bf16.msra.mxu0 0
      %1029 = vmatprep.subr.bf16.mxu0 0
      %1030 = vmatpush1.bf16.msra.mxu0 %v989
      %1031 = vmatprep.subr.bf16.mxu0 0
      %1032 = vmatpush1.bf16.msra.mxu0 %v988
      %1033 = vmatprep.subr.bf16.mxu0 0
      %1034 = vmatpush2.bf16.msra.mxu0 0
      %1035 = vmatprep.subr.bf16.mxu0 0
      %1036 = vmatpush2.bf16.msra.mxu0 0
      %1037 = vmatprep.subr.bf16.mxu0 0
      %1038 = vmatpush2.bf16.msra.mxu0 0
      %1039 = vmatprep.subr.bf16.mxu0 0
      %1040 = vmatpush2.bf16.msra.mxu0 0
      %1041 = vmatprep.subr.bf16.mxu0 0
      %1042 = vmatpush2.bf16.msra.mxu0 0
      %1043 = vmatprep.subr.bf16.mxu0 0
      %1044 = vmatpush2.bf16.msra.mxu0 0
      %1045 = vmatprep.subr.bf16.mxu0 0
      %1046 = vmatpush2.bf16.msra.mxu0 0
      %1047 = vmatprep.subr.bf16.mxu0 0
      %1048 = vmatpush2.bf16.msra.mxu0 0
      %1049 = vmatprep.mubr.bf16.mxu0 0
      %1050 = vmatmul.mubr.bf16.gmra.mxu0 %v994
      %v1051 = vpop.f32.mrf.mxu0
      %v1052 = vadd.f32 %v938, %v1051
      %v1053 = vpop.f32.mrf.mxu0
      %v1054 = vpop.f32.mrf.mxu0
      %v1055 = vadd.f32 %v938, %v1054
      %v1056 = vpop.f32.mrf.mxu0
      %1057 = vmatprep.mubr.bf16.mxu0 0
      %1058 = vmatmul.mubr.bf16.gmra.mxu0 %v997
      %v1059 = vpop.f32.mrf.mxu0
      %v1060 = vadd.f32 %v938, %v1059
      %v1061 = vpop.f32.mrf.mxu0
      %v1062 = vpop.f32.mrf.mxu0
      %v1063 = vadd.f32 %v938, %v1062
      %v1064 = vpop.f32.mrf.mxu0
      %1065 = vmatprep.mubr.bf16.mxu0 0
      %1066 = vmatmul.mubr.bf16.gmra.mxu0 %v1000
      %v1067 = vpop.f32.mrf.mxu0
      %v1068 = vadd.f32 %v938, %v1067
      %v1069 = vpop.f32.mrf.mxu0
      %v1070 = vpop.f32.mrf.mxu0
      %v1071 = vadd.f32 %v938, %v1070
      %v1072 = vpop.f32.mrf.mxu0
      %1073 = vmatprep.mubr.bf16.mxu0 0
      %1074 = vmatmul.mubr.bf16.gmra.mxu0 %v1003
      %v1075 = vpop.f32.mrf.mxu0
      %v1076 = vadd.f32 %v938, %v1075
      %v1077 = vpop.f32.mrf.mxu0
      %v1078 = vpop.f32.mrf.mxu0
      %v1079 = vadd.f32 %v938, %v1078
      %v1080 = vpop.f32.mrf.mxu0
      %1081 = vmatprep.mubr.bf16.mxu0 0
      %1082 = vmatmul.mubr.bf16.gmra.mxu0 %v1006
      %v1083 = vpop.f32.mrf.mxu0
      %v1084 = vadd.f32 %v938, %v1083
      %v1085 = vpop.f32.mrf.mxu0
      %v1086 = vpop.f32.mrf.mxu0
      %v1087 = vadd.f32 %v938, %v1086
      %v1088 = vpop.f32.mrf.mxu0
      %1089 = vmatprep.mubr.bf16.mxu0 0
      %1090 = vmatmul.mubr.bf16.gmra.mxu0 %v1009
      %v1091 = vpop.f32.mrf.mxu0
      %v1092 = vadd.f32 %v938, %v1091
      %v1093 = vpop.f32.mrf.mxu0
      %v1094 = vpop.f32.mrf.mxu0
      %v1095 = vadd.f32 %v938, %v1094
      %v1096 = vpop.f32.mrf.mxu0
      %1097 = vmatprep.mubr.bf16.mxu0 0
      %1098 = vmatmul.mubr.bf16.gmra.mxu0 %v1012
      %v1099 = vpop.f32.mrf.mxu0
      %v1100 = vadd.f32 %v938, %v1099
      %v1101 = vpop.f32.mrf.mxu0
      %v1102 = vpop.f32.mrf.mxu0
      %v1103 = vadd.f32 %v938, %v1102
      %v1104 = vpop.f32.mrf.mxu0
      %1105 = vmatprep.mubr.bf16.mxu0 0
      %1106 = vmatmul.mubr.bf16.gmra.mxu0 %v1015
      %v1107 = vpop.f32.mrf.mxu0
      %v1108 = vadd.f32 %v938, %v1107
      %v1109 = vpop.f32.mrf.mxu0
      %v1110 = vpop.f32.mrf.mxu0
      %v1111 = vadd.f32 %v938, %v1110
      %v1112 = vpop.f32.mrf.mxu0
      %1113 = vdwg.mxu0
      %vm1114 = vcmask 392192
      %1115 = vst.msk [vmem:[%s208] sm:$0xff] %vm1114, %v1052
      %1116 = vst.msk [vmem:[%s208 + $0x8] sm:$0xff] %vm1114, %v1055
      %1117 = vst.msk [vmem:[%s208 + $0x10] sm:$0xff] %vm1114, %v1060
      %1118 = vst.msk [vmem:[%s208 + $0x18] sm:$0xff] %vm1114, %v1063
      %1119 = vst.msk [vmem:[%s208 + $0x20] sm:$0xff] %vm1114, %v1068
      %1120 = vst.msk [vmem:[%s208 + $0x28] sm:$0xff] %vm1114, %v1071
      %1121 = vst.msk [vmem:[%s208 + $0x30] sm:$0xff] %vm1114, %v1076
      %1122 = vst.msk [vmem:[%s208 + $0x38] sm:$0xff] %vm1114, %v1079
      %s1123 = scalar_lea.vmem %s208, 64
      %1124 = vst.msk [vmem:[%s1123] sm:$0xff] %vm1114, %v1084
      %1125 = vst.msk [vmem:[%s1123 + $0x8] sm:$0xff] %vm1114, %v1087
      %1126 = vst.msk [vmem:[%s1123 + $0x10] sm:$0xff] %vm1114, %v1092
      %1127 = vst.msk [vmem:[%s1123 + $0x18] sm:$0xff] %vm1114, %v1095
      %1128 = vst.msk [vmem:[%s1123 + $0x20] sm:$0xff] %vm1114, %v1100
      %1129 = vst.msk [vmem:[%s1123 + $0x28] sm:$0xff] %vm1114, %v1103
      %1130 = vst.msk [vmem:[%s1123 + $0x30] sm:$0xff] %vm1114, %v1108
      %1131 = vst.msk [vmem:[%s1123 + $0x38] sm:$0xff] %vm1114, %v1111
      %v1132 = vld [vmem:[#allocation2 + $0x40] sm:$0xf]
      %v1133 = vld [vmem:[#allocation2 + $0x44] sm:$0xf]
      %v1134 = vld [vmem:[#allocation2 + $0x48] sm:$0xf]
      %v1135 = vld [vmem:[#allocation2 + $0x4c] sm:$0xf]
      %v1136 = vld [vmem:[#allocation2 + $0x50] sm:$0xf]
      %v1137 = vld [vmem:[#allocation2 + $0x54] sm:$0xf]
      %v1138 = vld [vmem:[#allocation2 + $0x58] sm:$0xf]
      %v1139 = vld [vmem:[#allocation2 + $0x5c] sm:$0xf]
      %v1140 = vld [vmem:[#allocation2 + $0x60] sm:$0xf]
      %v1141 = vld [vmem:[#allocation2 + $0x64] sm:$0xf]
      %v1142 = vld [vmem:[#allocation2 + $0x68] sm:$0xf]
      %v1143 = vld [vmem:[#allocation2 + $0x6c] sm:$0xf]
      %v1144 = vld [vmem:[#allocation2 + $0x70] sm:$0xf]
      %v1145 = vld [vmem:[#allocation2 + $0x74] sm:$0xf]
      %v1146 = vld [vmem:[#allocation2 + $0x78] sm:$0xf]
      %v1147 = vld [vmem:[#allocation2 + $0x7c] sm:$0xf]
      %v1164 = vunpack.c.l.b16 %v1132
      %v1165 = vunpack.c.l.b16 %v1133
      %v1166 = vunpack.c.l.b16 %v1134
      %v1167 = vunpack.c.l.b16 %v1135
      %v1168 = vunpack.c.l.b16 %v1136
      %v1169 = vunpack.c.l.b16 %v1137
      %v1170 = vunpack.c.l.b16 %v1138
      %v1171 = vunpack.c.l.b16 %v1139
      %v1172 = vunpack.c.l.b16 %v1140
      %v1173 = vunpack.c.l.b16 %v1141
      %v1174 = vunpack.c.l.b16 %v1142
      %v1175 = vunpack.c.l.b16 %v1143
      %v1176 = vunpack.c.l.b16 %v1144
      %v1177 = vunpack.c.l.b16 %v1145
      %v1178 = vunpack.c.l.b16 %v1146
      %v1179 = vunpack.c.l.b16 %v1147
      %v1180 = vpack.c.b16 %v1165, %v1164
      %v1181 = vpack.c.b16 %v1167, %v1166
      %v1182 = vpack.c.b16 %v1169, %v1168
      %v1183 = vpack.c.b16 %v1171, %v1170
      %v1184 = vpack.c.b16 %v1173, %v1172
      %v1185 = vpack.c.b16 %v1175, %v1174
      %v1186 = vpack.c.b16 %v1177, %v1176
      %v1187 = vpack.c.b16 %v1179, %v1178
      %v1189 = vsel %vm992, %v1180, 0
      %v1192 = vsel %vm992, %v1181, 0
      %v1195 = vsel %vm992, %v1182, 0
      %v1198 = vsel %vm992, %v1183, 0
      %v1201 = vsel %vm992, %v1184, 0
      %v1204 = vsel %vm992, %v1185, 0
      %v1207 = vsel %vm992, %v1186, 0
      %v1210 = vsel %vm992, %v1187, 0
      %1212 = vmatprep.subr.bf16.mxu0 0
      %1213 = vmatpush1.bf16.msra.mxu0 0
      %1214 = vmatprep.subr.bf16.mxu0 0
      %1215 = vmatpush1.bf16.msra.mxu0 0
      %1216 = vmatprep.subr.bf16.mxu0 0
      %1217 = vmatpush1.bf16.msra.mxu0 0
      %1218 = vmatprep.subr.bf16.mxu0 0
      %1219 = vmatpush1.bf16.msra.mxu0 0
      %1220 = vmatprep.subr.bf16.mxu0 0
      %1221 = vmatpush1.bf16.msra.mxu0 0
      %1222 = vmatprep.subr.bf16.mxu0 0
      %1223 = vmatpush1.bf16.msra.mxu0 0
      %1224 = vmatprep.subr.bf16.mxu0 0
      %1225 = vmatpush1.bf16.msra.mxu0 %v989
      %1226 = vmatprep.subr.bf16.mxu0 0
      %1227 = vmatpush1.bf16.msra.mxu0 %v988
      %1228 = vmatprep.subr.bf16.mxu0 0
      %1229 = vmatpush2.bf16.msra.mxu0 0
      %1230 = vmatprep.subr.bf16.mxu0 0
      %1231 = vmatpush2.bf16.msra.mxu0 0
      %1232 = vmatprep.subr.bf16.mxu0 0
      %1233 = vmatpush2.bf16.msra.mxu0 0
      %1234 = vmatprep.subr.bf16.mxu0 0
      %1235 = vmatpush2.bf16.msra.mxu0 0
      %1236 = vmatprep.subr.bf16.mxu0 0
      %1237 = vmatpush2.bf16.msra.mxu0 0
      %1238 = vmatprep.subr.bf16.mxu0 0
      %1239 = vmatpush2.bf16.msra.mxu0 0
      %1240 = vmatprep.subr.bf16.mxu0 0
      %1241 = vmatpush2.bf16.msra.mxu0 0
      %1242 = vmatprep.subr.bf16.mxu0 0
      %1243 = vmatpush2.bf16.msra.mxu0 0
      %1244 = vmatprep.mubr.bf16.mxu0 0
      %1245 = vmatmul.mubr.bf16.gmra.mxu0 %v1189
      %v1246 = vpop.f32.mrf.mxu0
      %v1247 = vadd.f32 %v938, %v1246
      %v1248 = vpop.f32.mrf.mxu0
      %v1249 = vpop.f32.mrf.mxu0
      %v1250 = vadd.f32 %v938, %v1249
      %v1251 = vpop.f32.mrf.mxu0
      %1252 = vmatprep.mubr.bf16.mxu0 0
      %1253 = vmatmul.mubr.bf16.gmra.mxu0 %v1192
      %v1254 = vpop.f32.mrf.mxu0
      %v1255 = vadd.f32 %v938, %v1254
      %v1256 = vpop.f32.mrf.mxu0
      %v1257 = vpop.f32.mrf.mxu0
      %v1258 = vadd.f32 %v938, %v1257
      %v1259 = vpop.f32.mrf.mxu0
      %1260 = vmatprep.mubr.bf16.mxu0 0
      %1261 = vmatmul.mubr.bf16.gmra.mxu0 %v1195
      %v1262 = vpop.f32.mrf.mxu0
      %v1263 = vadd.f32 %v938, %v1262
      %v1264 = vpop.f32.mrf.mxu0
      %v1265 = vpop.f32.mrf.mxu0
      %v1266 = vadd.f32 %v938, %v1265
      %v1267 = vpop.f32.mrf.mxu0
      %1268 = vmatprep.mubr.bf16.mxu0 0
      %1269 = vmatmul.mubr.bf16.gmra.mxu0 %v1198
      %v1270 = vpop.f32.mrf.mxu0
      %v1271 = vadd.f32 %v938, %v1270
      %v1272 = vpop.f32.mrf.mxu0
      %v1273 = vpop.f32.mrf.mxu0
      %v1274 = vadd.f32 %v938, %v1273
      %v1275 = vpop.f32.mrf.mxu0
      %1276 = vmatprep.mubr.bf16.mxu0 0
      %1277 = vmatmul.mubr.bf16.gmra.mxu0 %v1201
      %v1278 = vpop.f32.mrf.mxu0
      %v1279 = vadd.f32 %v938, %v1278
      %v1280 = vpop.f32.mrf.mxu0
      %v1281 = vpop.f32.mrf.mxu0
      %v1282 = vadd.f32 %v938, %v1281
      %v1283 = vpop.f32.mrf.mxu0
      %1284 = vmatprep.mubr.bf16.mxu0 0
      %1285 = vmatmul.mubr.bf16.gmra.mxu0 %v1204
      %v1286 = vpop.f32.mrf.mxu0
      %v1287 = vadd.f32 %v938, %v1286
      %v1288 = vpop.f32.mrf.mxu0
      %v1289 = vpop.f32.mrf.mxu0
      %v1290 = vadd.f32 %v938, %v1289
      %v1291 = vpop.f32.mrf.mxu0
      %1292 = vmatprep.mubr.bf16.mxu0 0
      %1293 = vmatmul.mubr.bf16.gmra.mxu0 %v1207
      %v1294 = vpop.f32.mrf.mxu0
      %v1295 = vadd.f32 %v938, %v1294
      %v1296 = vpop.f32.mrf.mxu0
      %v1297 = vpop.f32.mrf.mxu0
      %v1298 = vadd.f32 %v938, %v1297
      %v1299 = vpop.f32.mrf.mxu0
      %1300 = vmatprep.mubr.bf16.mxu0 0
      %1301 = vmatmul.mubr.bf16.gmra.mxu0 %v1210
      %v1302 = vpop.f32.mrf.mxu0
      %v1303 = vadd.f32 %v938, %v1302
      %v1304 = vpop.f32.mrf.mxu0
      %v1305 = vpop.f32.mrf.mxu0
      %v1306 = vadd.f32 %v938, %v1305
      %v1307 = vpop.f32.mrf.mxu0
      %1308 = vdwg.mxu0
      %s1309 = scalar_lea.vmem %s208, 128
      %1310 = vst.msk [vmem:[%s1309] sm:$0xff] %vm1114, %v1247
      %1311 = vst.msk [vmem:[%s1309 + $0x8] sm:$0xff] %vm1114, %v1250
      %1312 = vst.msk [vmem:[%s1309 + $0x10] sm:$0xff] %vm1114, %v1255
      %1313 = vst.msk [vmem:[%s1309 + $0x18] sm:$0xff] %vm1114, %v1258
      %1314 = vst.msk [vmem:[%s1309 + $0x20] sm:$0xff] %vm1114, %v1263
      %1315 = vst.msk [vmem:[%s1309 + $0x28] sm:$0xff] %vm1114, %v1266
      %1316 = vst.msk [vmem:[%s1309 + $0x30] sm:$0xff] %vm1114, %v1271
      %1317 = vst.msk [vmem:[%s1309 + $0x38] sm:$0xff] %vm1114, %v1274
      %s1318 = scalar_lea.vmem %s208, 192
      %1319 = vst.msk [vmem:[%s1318] sm:$0xff] %vm1114, %v1279
      %1320 = vst.msk [vmem:[%s1318 + $0x8] sm:$0xff] %vm1114, %v1282
      %1321 = vst.msk [vmem:[%s1318 + $0x10] sm:$0xff] %vm1114, %v1287
      %1322 = vst.msk [vmem:[%s1318 + $0x18] sm:$0xff] %vm1114, %v1290
      %1323 = vst.msk [vmem:[%s1318 + $0x20] sm:$0xff] %vm1114, %v1295
      %1324 = vst.msk [vmem:[%s1318 + $0x28] sm:$0xff] %vm1114, %v1298
      %1325 = vst.msk [vmem:[%s1318 + $0x30] sm:$0xff] %vm1114, %v1303
      %1326 = vst.msk [vmem:[%s1318 + $0x38] sm:$0xff] %vm1114, %v1306
      %v1327 = vld [vmem:[#allocation2 + $0x80] sm:$0xf]
      %v1328 = vld [vmem:[#allocation2 + $0x84] sm:$0xf]
      %v1329 = vld [vmem:[#allocation2 + $0x88] sm:$0xf]
      %v1330 = vld [vmem:[#allocation2 + $0x8c] sm:$0xf]
      %v1331 = vld [vmem:[#allocation2 + $0x90] sm:$0xf]
      %v1332 = vld [vmem:[#allocation2 + $0x94] sm:$0xf]
      %v1333 = vld [vmem:[#allocation2 + $0x98] sm:$0xf]
      %v1334 = vld [vmem:[#allocation2 + $0x9c] sm:$0xf]
      %v1335 = vld [vmem:[#allocation2 + $0xa0] sm:$0xf]
      %v1336 = vld [vmem:[#allocation2 + $0xa4] sm:$0xf]
      %v1337 = vld [vmem:[#allocation2 + $0xa8] sm:$0xf]
      %v1338 = vld [vmem:[#allocation2 + $0xac] sm:$0xf]
      %v1339 = vld [vmem:[#allocation2 + $0xb0] sm:$0xf]
      %v1340 = vld [vmem:[#allocation2 + $0xb4] sm:$0xf]
      %v1341 = vld [vmem:[#allocation2 + $0xb8] sm:$0xf]
      %v1342 = vld [vmem:[#allocation2 + $0xbc] sm:$0xf]
      %v1359 = vunpack.c.l.b16 %v1327
      %v1360 = vunpack.c.l.b16 %v1328
      %v1361 = vunpack.c.l.b16 %v1329
      %v1362 = vunpack.c.l.b16 %v1330
      %v1363 = vunpack.c.l.b16 %v1331
      %v1364 = vunpack.c.l.b16 %v1332
      %v1365 = vunpack.c.l.b16 %v1333
      %v1366 = vunpack.c.l.b16 %v1334
      %v1367 = vunpack.c.l.b16 %v1335
      %v1368 = vunpack.c.l.b16 %v1336
      %v1369 = vunpack.c.l.b16 %v1337
      %v1370 = vunpack.c.l.b16 %v1338
      %v1371 = vunpack.c.l.b16 %v1339
      %v1372 = vunpack.c.l.b16 %v1340
      %v1373 = vunpack.c.l.b16 %v1341
      %v1374 = vunpack.c.l.b16 %v1342
      %v1375 = vpack.c.b16 %v1360, %v1359
      %v1376 = vpack.c.b16 %v1362, %v1361
      %v1377 = vpack.c.b16 %v1364, %v1363
      %v1378 = vpack.c.b16 %v1366, %v1365
      %v1379 = vpack.c.b16 %v1368, %v1367
      %v1380 = vpack.c.b16 %v1370, %v1369
      %v1381 = vpack.c.b16 %v1372, %v1371
      %v1382 = vpack.c.b16 %v1374, %v1373
      %v1384 = vsel %vm992, %v1375, 0
      %v1387 = vsel %vm992, %v1376, 0
      %v1390 = vsel %vm992, %v1377, 0
      %v1393 = vsel %vm992, %v1378, 0
      %v1396 = vsel %vm992, %v1379, 0
      %v1399 = vsel %vm992, %v1380, 0
      %v1402 = vsel %vm992, %v1381, 0
      %v1405 = vsel %vm992, %v1382, 0
      %1407 = vmatprep.subr.bf16.mxu0 0
      %1408 = vmatpush1.bf16.msra.mxu0 0
      %1409 = vmatprep.subr.bf16.mxu0 0
      %1410 = vmatpush1.bf16.msra.mxu0 0
      %1411 = vmatprep.subr.bf16.mxu0 0
      %1412 = vmatpush1.bf16.msra.mxu0 0
      %1413 = vmatprep.subr.bf16.mxu0 0
      %1414 = vmatpush1.bf16.msra.mxu0 0
      %1415 = vmatprep.subr.bf16.mxu0 0
      %1416 = vmatpush1.bf16.msra.mxu0 0
      %1417 = vmatprep.subr.bf16.mxu0 0
      %1418 = vmatpush1.bf16.msra.mxu0 0
      %1419 = vmatprep.subr.bf16.mxu0 0
      %1420 = vmatpush1.bf16.msra.mxu0 %v989
      %1421 = vmatprep.subr.bf16.mxu0 0
      %1422 = vmatpush1.bf16.msra.mxu0 %v988
      %1423 = vmatprep.subr.bf16.mxu0 0
      %1424 = vmatpush2.bf16.msra.mxu0 0
      %1425 = vmatprep.subr.bf16.mxu0 0
      %1426 = vmatpush2.bf16.msra.mxu0 0
      %1427 = vmatprep.subr.bf16.mxu0 0
      %1428 = vmatpush2.bf16.msra.mxu0 0
      %1429 = vmatprep.subr.bf16.mxu0 0
      %1430 = vmatpush2.bf16.msra.mxu0 0
      %1431 = vmatprep.subr.bf16.mxu0 0
      %1432 = vmatpush2.bf16.msra.mxu0 0
      %1433 = vmatprep.subr.bf16.mxu0 0
      %1434 = vmatpush2.bf16.msra.mxu0 0
      %1435 = vmatprep.subr.bf16.mxu0 0
      %1436 = vmatpush2.bf16.msra.mxu0 0
      %1437 = vmatprep.subr.bf16.mxu0 0
      %1438 = vmatpush2.bf16.msra.mxu0 0
      %1439 = vmatprep.mubr.bf16.mxu0 0
      %1440 = vmatmul.mubr.bf16.gmra.mxu0 %v1384
      %v1441 = vpop.f32.mrf.mxu0
      %v1442 = vadd.f32 %v938, %v1441
      %v1443 = vpop.f32.mrf.mxu0
      %v1444 = vpop.f32.mrf.mxu0
      %v1445 = vadd.f32 %v938, %v1444
      %v1446 = vpop.f32.mrf.mxu0
      %1447 = vmatprep.mubr.bf16.mxu0 0
      %1448 = vmatmul.mubr.bf16.gmra.mxu0 %v1387
      %v1449 = vpop.f32.mrf.mxu0
      %v1450 = vadd.f32 %v938, %v1449
      %v1451 = vpop.f32.mrf.mxu0
      %v1452 = vpop.f32.mrf.mxu0
      %v1453 = vadd.f32 %v938, %v1452
      %v1454 = vpop.f32.mrf.mxu0
      %1455 = vmatprep.mubr.bf16.mxu0 0
      %1456 = vmatmul.mubr.bf16.gmra.mxu0 %v1390
      %v1457 = vpop.f32.mrf.mxu0
      %v1458 = vadd.f32 %v938, %v1457
      %v1459 = vpop.f32.mrf.mxu0
      %v1460 = vpop.f32.mrf.mxu0
      %v1461 = vadd.f32 %v938, %v1460
      %v1462 = vpop.f32.mrf.mxu0
      %1463 = vmatprep.mubr.bf16.mxu0 0
      %1464 = vmatmul.mubr.bf16.gmra.mxu0 %v1393
      %v1465 = vpop.f32.mrf.mxu0
      %v1466 = vadd.f32 %v938, %v1465
      %v1467 = vpop.f32.mrf.mxu0
      %v1468 = vpop.f32.mrf.mxu0
      %v1469 = vadd.f32 %v938, %v1468
      %v1470 = vpop.f32.mrf.mxu0
      %1471 = vmatprep.mubr.bf16.mxu0 0
      %1472 = vmatmul.mubr.bf16.gmra.mxu0 %v1396
      %v1473 = vpop.f32.mrf.mxu0
      %v1474 = vadd.f32 %v938, %v1473
      %v1475 = vpop.f32.mrf.mxu0
      %v1476 = vpop.f32.mrf.mxu0
      %v1477 = vadd.f32 %v938, %v1476
      %v1478 = vpop.f32.mrf.mxu0
      %1479 = vmatprep.mubr.bf16.mxu0 0
      %1480 = vmatmul.mubr.bf16.gmra.mxu0 %v1399
      %v1481 = vpop.f32.mrf.mxu0
      %v1482 = vadd.f32 %v938, %v1481
      %v1483 = vpop.f32.mrf.mxu0
      %v1484 = vpop.f32.mrf.mxu0
      %v1485 = vadd.f32 %v938, %v1484
      %v1486 = vpop.f32.mrf.mxu0
      %1487 = vmatprep.mubr.bf16.mxu0 0
      %1488 = vmatmul.mubr.bf16.gmra.mxu0 %v1402
      %v1489 = vpop.f32.mrf.mxu0
      %v1490 = vadd.f32 %v938, %v1489
      %v1491 = vpop.f32.mrf.mxu0
      %v1492 = vpop.f32.mrf.mxu0
      %v1493 = vadd.f32 %v938, %v1492
      %v1494 = vpop.f32.mrf.mxu0
      %1495 = vmatprep.mubr.bf16.mxu0 0
      %1496 = vmatmul.mubr.bf16.gmra.mxu0 %v1405
      %v1497 = vpop.f32.mrf.mxu0
      %v1498 = vadd.f32 %v938, %v1497
      %v1499 = vpop.f32.mrf.mxu0
      %v1500 = vpop.f32.mrf.mxu0
      %v1501 = vadd.f32 %v938, %v1500
      %v1502 = vpop.f32.mrf.mxu0
      %1503 = vdwg.mxu0
      %s1504 = scalar_lea.vmem %s208, 256
      %1505 = vst.msk [vmem:[%s1504] sm:$0xff] %vm1114, %v1442
      %1506 = vst.msk [vmem:[%s1504 + $0x8] sm:$0xff] %vm1114, %v1445
      %1507 = vst.msk [vmem:[%s1504 + $0x10] sm:$0xff] %vm1114, %v1450
      %1508 = vst.msk [vmem:[%s1504 + $0x18] sm:$0xff] %vm1114, %v1453
      %1509 = vst.msk [vmem:[%s1504 + $0x20] sm:$0xff] %vm1114, %v1458
      %1510 = vst.msk [vmem:[%s1504 + $0x28] sm:$0xff] %vm1114, %v1461
      %1511 = vst.msk [vmem:[%s1504 + $0x30] sm:$0xff] %vm1114, %v1466
      %1512 = vst.msk [vmem:[%s1504 + $0x38] sm:$0xff] %vm1114, %v1469
      %s1513 = scalar_lea.vmem %s208, 320
      %1514 = vst.msk [vmem:[%s1513] sm:$0xff] %vm1114, %v1474
      %1515 = vst.msk [vmem:[%s1513 + $0x8] sm:$0xff] %vm1114, %v1477
      %1516 = vst.msk [vmem:[%s1513 + $0x10] sm:$0xff] %vm1114, %v1482
      %1517 = vst.msk [vmem:[%s1513 + $0x18] sm:$0xff] %vm1114, %v1485
      %1518 = vst.msk [vmem:[%s1513 + $0x20] sm:$0xff] %vm1114, %v1490
      %1519 = vst.msk [vmem:[%s1513 + $0x28] sm:$0xff] %vm1114, %v1493
      %1520 = vst.msk [vmem:[%s1513 + $0x30] sm:$0xff] %vm1114, %v1498
      %1521 = vst.msk [vmem:[%s1513 + $0x38] sm:$0xff] %vm1114, %v1501
      %v1522 = vld [vmem:[#allocation2 + $0xc0] sm:$0xf]
      %v1523 = vld [vmem:[#allocation2 + $0xc4] sm:$0xf]
      %v1524 = vld [vmem:[#allocation2 + $0xc8] sm:$0xf]
      %v1525 = vld [vmem:[#allocation2 + $0xcc] sm:$0xf]
      %v1526 = vld [vmem:[#allocation2 + $0xd0] sm:$0xf]
      %v1527 = vld [vmem:[#allocation2 + $0xd4] sm:$0xf]
      %v1528 = vld [vmem:[#allocation2 + $0xd8] sm:$0xf]
      %v1529 = vld [vmem:[#allocation2 + $0xdc] sm:$0xf]
      %v1530 = vld [vmem:[#allocation2 + $0xe0] sm:$0xf]
      %v1531 = vld [vmem:[#allocation2 + $0xe4] sm:$0xf]
      %v1532 = vld [vmem:[#allocation2 + $0xe8] sm:$0xf]
      %v1533 = vld [vmem:[#allocation2 + $0xec] sm:$0xf]
      %v1534 = vld [vmem:[#allocation2 + $0xf0] sm:$0xf]
      %v1535 = vld [vmem:[#allocation2 + $0xf4] sm:$0xf]
      %v1536 = vld [vmem:[#allocation2 + $0xf8] sm:$0xf]
      %v1537 = vld [vmem:[#allocation2 + $0xfc] sm:$0xf]
      %v1554 = vunpack.c.l.b16 %v1522
      %v1555 = vunpack.c.l.b16 %v1523
      %v1556 = vunpack.c.l.b16 %v1524
      %v1557 = vunpack.c.l.b16 %v1525
      %v1558 = vunpack.c.l.b16 %v1526
      %v1559 = vunpack.c.l.b16 %v1527
      %v1560 = vunpack.c.l.b16 %v1528
      %v1561 = vunpack.c.l.b16 %v1529
      %v1562 = vunpack.c.l.b16 %v1530
      %v1563 = vunpack.c.l.b16 %v1531
      %v1564 = vunpack.c.l.b16 %v1532
      %v1565 = vunpack.c.l.b16 %v1533
      %v1566 = vunpack.c.l.b16 %v1534
      %v1567 = vunpack.c.l.b16 %v1535
      %v1568 = vunpack.c.l.b16 %v1536
      %v1569 = vunpack.c.l.b16 %v1537
      %v1570 = vpack.c.b16 %v1555, %v1554
      %v1571 = vpack.c.b16 %v1557, %v1556
      %v1572 = vpack.c.b16 %v1559, %v1558
      %v1573 = vpack.c.b16 %v1561, %v1560
      %v1574 = vpack.c.b16 %v1563, %v1562
      %v1575 = vpack.c.b16 %v1565, %v1564
      %v1576 = vpack.c.b16 %v1567, %v1566
      %v1577 = vpack.c.b16 %v1569, %v1568
      %v1579 = vsel %vm992, %v1570, 0
      %v1582 = vsel %vm992, %v1571, 0
      %v1585 = vsel %vm992, %v1572, 0
      %v1588 = vsel %vm992, %v1573, 0
      %v1591 = vsel %vm992, %v1574, 0
      %v1594 = vsel %vm992, %v1575, 0
      %v1597 = vsel %vm992, %v1576, 0
      %v1600 = vsel %vm992, %v1577, 0
      %1602 = vmatprep.subr.bf16.mxu0 0
      %1603 = vmatpush1.bf16.msra.mxu0 0
      %1604 = vmatprep.subr.bf16.mxu0 0
      %1605 = vmatpush1.bf16.msra.mxu0 0
      %1606 = vmatprep.subr.bf16.mxu0 0
      %1607 = vmatpush1.bf16.msra.mxu0 0
      %1608 = vmatprep.subr.bf16.mxu0 0
      %1609 = vmatpush1.bf16.msra.mxu0 0
      %1610 = vmatprep.subr.bf16.mxu0 0
      %1611 = vmatpush1.bf16.msra.mxu0 0
      %1612 = vmatprep.subr.bf16.mxu0 0
      %1613 = vmatpush1.bf16.msra.mxu0 0
      %1614 = vmatprep.subr.bf16.mxu0 0
      %1615 = vmatpush1.bf16.msra.mxu0 %v989
      %1616 = vmatprep.subr.bf16.mxu0 0
      %1617 = vmatpush1.bf16.msra.mxu0 %v988
      %1618 = vmatprep.subr.bf16.mxu0 0
      %1619 = vmatpush2.bf16.msra.mxu0 0
      %1620 = vmatprep.subr.bf16.mxu0 0
      %1621 = vmatpush2.bf16.msra.mxu0 0
      %1622 = vmatprep.subr.bf16.mxu0 0
      %1623 = vmatpush2.bf16.msra.mxu0 0
      %1624 = vmatprep.subr.bf16.mxu0 0
      %1625 = vmatpush2.bf16.msra.mxu0 0
      %1626 = vmatprep.subr.bf16.mxu0 0
      %1627 = vmatpush2.bf16.msra.mxu0 0
      %1628 = vmatprep.subr.bf16.mxu0 0
      %1629 = vmatpush2.bf16.msra.mxu0 0
      %1630 = vmatprep.subr.bf16.mxu0 0
      %1631 = vmatpush2.bf16.msra.mxu0 0
      %1632 = vmatprep.subr.bf16.mxu0 0
      %1633 = vmatpush2.bf16.msra.mxu0 0
      %1634 = vmatprep.mubr.bf16.mxu0 0
      %1635 = vmatmul.mubr.bf16.gmra.mxu0 %v1579
      %v1636 = vpop.f32.mrf.mxu0
      %v1637 = vadd.f32 %v938, %v1636
      %v1638 = vpop.f32.mrf.mxu0
      %v1639 = vpop.f32.mrf.mxu0
      %v1640 = vadd.f32 %v938, %v1639
      %v1641 = vpop.f32.mrf.mxu0
      %1642 = vmatprep.mubr.bf16.mxu0 0
      %1643 = vmatmul.mubr.bf16.gmra.mxu0 %v1582
      %v1644 = vpop.f32.mrf.mxu0
      %v1645 = vadd.f32 %v938, %v1644
      %v1646 = vpop.f32.mrf.mxu0
      %v1647 = vpop.f32.mrf.mxu0
      %v1648 = vadd.f32 %v938, %v1647
      %v1649 = vpop.f32.mrf.mxu0
      %1650 = vmatprep.mubr.bf16.mxu0 0
      %1651 = vmatmul.mubr.bf16.gmra.mxu0 %v1585
      %v1652 = vpop.f32.mrf.mxu0
      %v1653 = vadd.f32 %v938, %v1652
      %v1654 = vpop.f32.mrf.mxu0
      %v1655 = vpop.f32.mrf.mxu0
      %v1656 = vadd.f32 %v938, %v1655
      %v1657 = vpop.f32.mrf.mxu0
      %1658 = vmatprep.mubr.bf16.mxu0 0
      %1659 = vmatmul.mubr.bf16.gmra.mxu0 %v1588
      %v1660 = vpop.f32.mrf.mxu0
      %v1661 = vadd.f32 %v938, %v1660
      %v1662 = vpop.f32.mrf.mxu0
      %v1663 = vpop.f32.mrf.mxu0
      %v1664 = vadd.f32 %v938, %v1663
      %v1665 = vpop.f32.mrf.mxu0
      %1666 = vmatprep.mubr.bf16.mxu0 0
      %1667 = vmatmul.mubr.bf16.gmra.mxu0 %v1591
      %v1668 = vpop.f32.mrf.mxu0
      %v1669 = vadd.f32 %v938, %v1668
      %v1670 = vpop.f32.mrf.mxu0
      %v1671 = vpop.f32.mrf.mxu0
      %v1672 = vadd.f32 %v938, %v1671
      %v1673 = vpop.f32.mrf.mxu0
      %1674 = vmatprep.mubr.bf16.mxu0 0
      %1675 = vmatmul.mubr.bf16.gmra.mxu0 %v1594
      %v1676 = vpop.f32.mrf.mxu0
      %v1677 = vadd.f32 %v938, %v1676
      %v1678 = vpop.f32.mrf.mxu0
      %v1679 = vpop.f32.mrf.mxu0
      %v1680 = vadd.f32 %v938, %v1679
      %v1681 = vpop.f32.mrf.mxu0
      %1682 = vmatprep.mubr.bf16.mxu0 0
      %1683 = vmatmul.mubr.bf16.gmra.mxu0 %v1597
      %v1684 = vpop.f32.mrf.mxu0
      %v1685 = vadd.f32 %v938, %v1684
      %v1686 = vpop.f32.mrf.mxu0
      %v1687 = vpop.f32.mrf.mxu0
      %v1688 = vadd.f32 %v938, %v1687
      %v1689 = vpop.f32.mrf.mxu0
      %1690 = vmatprep.mubr.bf16.mxu0 0
      %1691 = vmatmul.mubr.bf16.gmra.mxu0 %v1600
      %v1692 = vpop.f32.mrf.mxu0
      %v1693 = vadd.f32 %v938, %v1692
      %v1694 = vpop.f32.mrf.mxu0
      %v1695 = vpop.f32.mrf.mxu0
      %v1696 = vadd.f32 %v938, %v1695
      %v1697 = vpop.f32.mrf.mxu0
      %1698 = vdwg.mxu0
      %s1699 = scalar_lea.vmem %s208, 384
      %1700 = vst.msk [vmem:[%s1699] sm:$0xff] %vm1114, %v1637
      %1701 = vst.msk [vmem:[%s1699 + $0x8] sm:$0xff] %vm1114, %v1640
      %1702 = vst.msk [vmem:[%s1699 + $0x10] sm:$0xff] %vm1114, %v1645
      %1703 = vst.msk [vmem:[%s1699 + $0x18] sm:$0xff] %vm1114, %v1648
      %1704 = vst.msk [vmem:[%s1699 + $0x20] sm:$0xff] %vm1114, %v1653
      %1705 = vst.msk [vmem:[%s1699 + $0x28] sm:$0xff] %vm1114, %v1656
      %1706 = vst.msk [vmem:[%s1699 + $0x30] sm:$0xff] %vm1114, %v1661
      %1707 = vst.msk [vmem:[%s1699 + $0x38] sm:$0xff] %vm1114, %v1664
      %s1708 = scalar_lea.vmem %s208, 448
      %1709 = vst.msk [vmem:[%s1708] sm:$0xff] %vm1114, %v1669
      %1710 = vst.msk [vmem:[%s1708 + $0x8] sm:$0xff] %vm1114, %v1672
      %1711 = vst.msk [vmem:[%s1708 + $0x10] sm:$0xff] %vm1114, %v1677
      %1712 = vst.msk [vmem:[%s1708 + $0x18] sm:$0xff] %vm1114, %v1680
      %1713 = vst.msk [vmem:[%s1708 + $0x20] sm:$0xff] %vm1114, %v1685
      %1714 = vst.msk [vmem:[%s1708 + $0x28] sm:$0xff] %vm1114, %v1688
      %1715 = vst.msk [vmem:[%s1708 + $0x30] sm:$0xff] %vm1114, %v1693
      %1716 = vst.msk [vmem:[%s1708 + $0x38] sm:$0xff] %vm1114, %v1696
      %s1717 = smul.u32 8, %s19
      %p1718 = scmp.lt.s32.totalorder %s18, 1
      %s1719 = scalar_select %p1718, %s18, 1
      %p1720 = scmp.lt.s32.totalorder %s1717, 7
      %s1721 = scalar_select %p1720, %s1717, 7
      %s1722 = smul.addr %s1719, 64
      %s1723 = sadd.s32 %s1721, %s1722
      %s1724 = smul.addr %s1723, 8
      %s1725 = scalar_lea.vmem %s3, %s1724
      // Predicated region
      $region33: #{tpu_custom_call.1} parent=31 // pred_check
        %p1726 = pneg %p116
      $region34: #{tpu_custom_call.1} parent=31 // pred_check_branch
        %1728 = sbr.rel (%p1726) target = $region36
      $region35: #{tpu_custom_call.1} parent=31 // pred_region
        %s1729 = smul.u32 8, %s19
      $region36: #{tpu_custom_call.1} parent=31 // pred_fallthru
        _
    $region32: #{tpu_custom_call.1} parent=5 // pred_fallthru
      _
    %p1730 = scmp.le.s32.totalorder 2, %s9
    // Predicated region
    $region37: #{tpu_custom_call.1} parent=5 // pred_check
      %p1731 = pneg %p1730
    $region38: #{tpu_custom_call.1} parent=5 // pred_check_branch
      %1733 = sbr.rel (%p1731) target = $region40
    $region39: #{tpu_custom_call.1} parent=5 // pred_region
      %s1734 = ssub.s32 %s9, 2
      // Predicated region
      $region41: #{tpu_custom_call.1} parent=39 // pred_check
        %p1735 = pneg %p122
      $region42: #{tpu_custom_call.1} parent=39 // pred_check_branch
        %1737 = sbr.rel (%p1735) target = $region44
      $region43: #{tpu_custom_call.1} parent=39 // pred_region
        %s1738 = smul.u32 8, %s21
        %p1739 = scmp.lt.s32.totalorder %s20, 1
        %s1740 = scalar_select %p1739, %s20, 1
        %p1741 = scmp.lt.s32.totalorder %s1738, 7
        %s1742 = scalar_select %p1741, %s1738, 7
        %s1743 = smul.addr %s1740, 64
        %s1744 = sadd.s32 %s1742, %s1743
        %s1745 = smul.addr %s1744, 8
        %s1746 = scalar_lea.vmem %s3, %s1745
      $region44: #{tpu_custom_call.1} parent=39 // pred_fallthru
        _
    $region40: #{tpu_custom_call.1} parent=5 // pred_fallthru
      _
  $region6: #{tpu_custom_call.1} parent=0 // loop_footer
    %s13 = sadd.s32 1, %s9
  $region7: #{tpu_custom_call.1} parent=0 // loop_footer_branch
    %8 = sbr.rel target = $region3
  $region8: #{tpu_custom_call.1} parent=0 // loop_exit
    _

</llo_original>
